<compile_context>
chip_gen: v5e
topology: v5e:2x2
jax: 0.10.0
libtpu: 0.0.40
codegen_flags: <defaults>
</compile_context>

<pallas_src>
import functools

import jax
import jax.numpy as jnp
from jax import lax
from jax.experimental import pallas as pl
from jax.experimental.pallas import tpu as pltpu

RATIO = 0.8
HIDDEN = 128

# packed bias/pool row indices (scal array)
_BR1, _BR2, _BR3, _P1, _P2, _P3, _B1, _B2, _B3 = range(9)
_NSCAL = 9
# packed conv-weight slots
_WR1, _WO1, _WR2, _WO2, _WR3, _WO3 = range(6)
# packed mlp-weight slots
_W1T, _W1B, _W2, _W3 = range(4)


# ----------------------------------------------------------------------------
# Fused per-block kernel: 3x (GraphConv+ReLU -> TopKPool -> readout) -> MLP
# ----------------------------------------------------------------------------
def _net_block_kernel(x_ref, a_ref, convw_ref, mlpw_ref, scal_ref, o_ref, *,
                      graphs_per_block, per_graph, ratio):
    f32 = jnp.float32
    bf16 = jnp.bfloat16
    gpb, P = graphs_per_block, per_graph
    bn = gpb * P
    neg_big = f32(-1e30)

    x = x_ref[...]            # (bn, 128) zero-padded node features (f32)
    A = a_ref[...]            # (bn, bn)  block-diagonal adjacency slice (bf16 0/1)

    # --- masks built in-kernel (no N^2 mask inputs; comparisons + tiny matmul)
    i_row = lax.broadcasted_iota(jnp.int32, (bn, bn), 0)
    j_col = lax.broadcasted_iota(jnp.int32, (bn, bn), 1)
    lt = j_col < i_row                                        # tie-break: j before i

    node_i = lax.broadcasted_iota(jnp.int32, (bn, gpb), 0)
    g_i = lax.broadcasted_iota(jnp.int32, (bn, gpb), 1)
    member = ((node_i >= g_i * P) & (node_i < (g_i + 1) * P)).astype(f32)   # (bn, gpb)
    node_j = lax.broadcasted_iota(jnp.int32, (gpb, bn), 1)
    g_j = lax.broadcasted_iota(jnp.int32, (gpb, bn), 0)
    member_t = ((node_j >= g_j * P) & (node_j < (g_j + 1) * P)).astype(f32)  # (gpb, bn)
    same = jnp.dot(member, member_t, preferred_element_type=f32)             # (bn, bn)

    ones_col = jnp.ones((bn, 1), f32)

    def graphconv_relu(h, wr_i, wo_i, br_i):
        # out = relu( lin_rel(A @ h) + lin_root(h) ); A is 0/1 so bf16 is exact,
        # h is cast to bf16 only for the aggregation matmul (f32 accumulate).
        agg = jnp.dot(A, h.astype(bf16), preferred_element_type=f32)
        out = jnp.dot(agg, convw_ref[wr_i], preferred_element_type=f32)
        out = out + scal_ref[br_i:br_i + 1, :]
        out = out + jnp.dot(h, convw_ref[wo_i], preferred_element_type=f32)
        return jnp.maximum(out, 0.0)

    def topk_pool(h, p_i, valid):
        # score = tanh(h . w / ||w||); pool weight is pre-normalized in wrapper.
        p_row = scal_ref[p_i:p_i + 1, :]                                  # (1, 128)
        s = jnp.tanh(lax.dot_general(h, p_row, (((1,), (1,)), ((), ())),
                                     preferred_element_type=f32))          # (bn, 1)
        s_m = jnp.where(valid > 0.0, s, neg_big)                           # drop removed
        # lane-layout replica of masked scores: K=1 outer product on the MXU,
        # s_j[i, j] = s_m[j] (no in-kernel transpose / relayout).
        s_j = lax.dot_general(ones_col, s_m, (((1,), (1,)), ((), ())),
                              preferred_element_type=f32)                  # (bn, bn)
        better = (s_j > s_m) | ((s_j == s_m) & lt)
        rank = jnp.sum(jnp.where(better, same, 0.0), axis=1, keepdims=True)
        # per-node "valid nodes in my graph" via two skinny membership matmuls
        counts_g = jnp.dot(member_t, valid, preferred_element_type=f32)    # (gpb, 1)
        n_valid = jnp.dot(member, counts_g, preferred_element_type=f32)    # (bn, 1)
        k_node = jnp.minimum(jnp.ceil(ratio * n_valid), n_valid)
        keep = jnp.where(rank < k_node, valid, 0.0)
        # gated features == x[perm] * score[perm]; keep-mask replaces the perm
        return h * s * keep, keep

    def readout(hg, keep):
        # gap: segment mean as one skinny matmul + exact division
        counts = jnp.dot(member_t, keep, preferred_element_type=f32)       # (gpb, 1)
        sums = jnp.dot(member_t, hg, preferred_element_type=f32)           # (gpb, 128)
        gap = sums / jnp.maximum(counts, 1.0)
        # gmp: mask once, reshape to (graphs, nodes_per_graph, F), one max pass
        masked = jnp.where(keep > 0.0, hg, neg_big)
        gmp = jnp.max(masked.reshape(gpb, P, HIDDEN), axis=1)              # (gpb, 128)
        gmp = jnp.where(counts > 0.0, gmp, 0.0)                            # empty-graph guard
        return gmp, gap

    valid = jnp.ones((bn, 1), f32)

    h = graphconv_relu(x, _WR1, _WO1, _BR1)
    h, valid = topk_pool(h, _P1, valid)
    gmp1, gap1 = readout(h, valid)

    h = graphconv_relu(h, _WR2, _WO2, _BR2)
    h, valid = topk_pool(h, _P2, valid)
    gmp2, gap2 = readout(h, valid)

    h = graphconv_relu(h, _WR3, _WO3, _BR3)
    h, valid = topk_pool(h, _P3, valid)
    gmp3, gap3 = readout(h, valid)

    gmp_sum = gmp1 + gmp2 + gmp3
    gap_sum = gap1 + gap2 + gap3

    # lin1 on concat([gmp, gap], dim=1) == gmp @ W1[:128] + gap @ W1[128:]
    h1 = (jnp.dot(gmp_sum, mlpw_ref[_W1T], preferred_element_type=f32)
          + jnp.dot(gap_sum, mlpw_ref[_W1B], preferred_element_type=f32)
          + scal_ref[_B1:_B1 + 1, :])
    h1 = jnp.maximum(h1, 0.0)
    # F.dropout(p=0.5, training=False) -> identity in eval mode
    h2 = jnp.maximum(
        jnp.dot(h1, mlpw_ref[_W2], preferred_element_type=f32)
        + scal_ref[_B2:_B2 + 1, :], 0.0)
    # lin3 padded to 128 output lanes (real logit lives in column 0)
    o_ref[...] = (jnp.dot(h2, mlpw_ref[_W3], preferred_element_type=f32)
                  + scal_ref[_B3:_B3 + 1, :])


# ----------------------------------------------------------------------------
# Wrapper: weight packing / lane padding / block extraction + pallas_call
# ----------------------------------------------------------------------------
def _pack_params(params):
    f32 = jnp.float32
    wrel1, brel1, wroot1 = params["conv1"]
    wrel2, brel2, wroot2 = params["conv2"]
    wrel3, brel3, wroot3 = params["conv3"]
    f_in = wrel1.shape[0]
    pad_in = ((0, HIDDEN - f_in), (0, 0))          # zero input rows: exact
    convw = jnp.stack([jnp.pad(wrel1, pad_in), jnp.pad(wroot1, pad_in),
                       wrel2, wroot2, wrel3, wroot3]).astype(f32)      # (6,128,128)

    l1w, l1b = params["lin1"]
    l2w, l2b = params["lin2"]
    l3w, l3b = params["lin3"]
    w2p = jnp.pad(l2w, ((0, 0), (0, HIDDEN - l2w.shape[1])))           # lane-dense h2
    w3p = jnp.pad(l3w, ((0, HIDDEN - l3w.shape[0]),
                        (0, HIDDEN - l3w.shape[1])))                   # lane-dense out
    mlpw = jnp.stack([l1w[:HIDDEN], l1w[HIDDEN:], w2p, w3p]).astype(f32)  # (4,128,128)

    def p_hat(p):   # pre-normalized TopK projection, stored as a lane row
        return (p / jnp.linalg.norm(p)).reshape(1, HIDDEN)

    def row(b):
        b = b.reshape(1, -1)
        return jnp.pad(b, ((0, 0), (0, HIDDEN - b.shape[1])))

    scal = jnp.concatenate([
        row(brel1), row(brel2), row(brel3),
        p_hat(params["pool1"]), p_hat(params["pool2"]), p_hat(params["pool3"]),
        row(l1b), row(l2b), row(l3b)], axis=0).astype(f32)             # (9, 128)
    return convw, mlpw, scal


def net_forward(x, A, params, *, num_graphs, ratio=RATIO, graphs_per_block=1):
    """Batch layout: num_graphs contiguous, equal-size graphs (block-diagonal A).

    # TODO(synk): ragged graph batches must be padded per-graph to a uniform
    # node count by the caller (padded nodes: zero features, no edges).
    """
    f32 = jnp.float32
    n, f_in = x.shape
    per_graph = n // num_graphs
    assert per_graph * num_graphs == n
    gpb = graphs_per_block
    assert num_graphs % gpb == 0
    n_blocks = num_graphs // gpb
    bn = gpb * per_graph

    x_pad = jnp.pad(x.astype(f32), ((0, 0), (0, HIDDEN - f_in)))   # lane-align features
    x_blocks = x_pad.reshape(n_blocks, bn, HIDDEN)
    # Only the diagonal blocks of A matter (no cross-graph edges); 0/1 values
    # are exact in bf16 -> halves HBM/VMEM for the biggest input.
    a_blocks = jnp.stack(
        [A[i * bn:(i + 1) * bn, i * bn:(i + 1) * bn] for i in range(n_blocks)]
    ).astype(jnp.bfloat16)

    convw, mlpw, scal = _pack_params(params)

    kernel = functools.partial(_net_block_kernel, graphs_per_block=gpb,
                               per_graph=per_graph, ratio=ratio)
    out = pl.pallas_call(
        kernel,
        out_shape=jax.ShapeDtypeStruct((n_blocks, gpb, HIDDEN), f32),
        grid=(n_blocks,),
        in_specs=[
            pl.BlockSpec((None, bn, HIDDEN), lambda i: (i, 0, 0)),     # x block
            pl.BlockSpec((None, bn, bn), lambda i: (i, 0, 0)),         # A block (bf16)
            pl.BlockSpec((6, HIDDEN, HIDDEN), lambda i: (0, 0, 0)),    # conv weights
            pl.BlockSpec((4, HIDDEN, HIDDEN), lambda i: (0, 0, 0)),    # MLP weights
            pl.BlockSpec((_NSCAL, HIDDEN), lambda i: (0, 0)),          # biases / pools
        ],
        out_specs=pl.BlockSpec((None, gpb, HIDDEN), lambda i: (i, 0, 0)),
        compiler_params=pltpu.CompilerParams(
            # parallel graph-block axis: feeds both TensorCores on v7x
            dimension_semantics=("parallel",),
            # explicit scoped-VMEM budget; <=64 MiB stays legal on v7x, raise
            # toward ~100 MiB on v5e/v6e when batching many more nodes.
            vmem_limit_bytes=64 * 1024 * 1024),
    )(x_blocks, a_blocks, convw, mlpw, scal)
    # real (G, 1) logits live in lane 0 of the lane-dense output
    return out.reshape(num_graphs, HIDDEN)[:, :1]


# ----------------------------------------------------------------------------
# Deterministic parameter init (shapes mirror Net.__init__)
# ----------------------------------------------------------------------------
def init_params(key):
    def linear(k, fin, fout, bias=True):
        bound = 1.0 / jnp.sqrt(jnp.float32(fin))
        kw, kb = jax.random.split(k)
        w = jax.random.uniform(kw, (fin, fout), jnp.float32, -bound, bound)
        b = jax.random.uniform(kb, (1, fout), jnp.float32, -bound, bound) if bias else None
        return w, b

    keys = jax.random.split(key, 12)
    params = {}
    wrel1, brel1 = linear(keys[0], 20, 128)
    wroot1, _ = linear(keys[1], 20, 128, bias=False)
    params["conv1"] = (wrel1, brel1, wroot1)
    wrel2, brel2 = linear(keys[2], 128, 128)
    wroot2, _ = linear(keys[3], 128, 128, bias=False)
    params["conv2"] = (wrel2, brel2, wroot2)
    wrel3, brel3 = linear(keys[4], 128, 128)
    wroot3, _ = linear(keys[5], 128, 128, bias=False)
    params["conv3"] = (wrel3, brel3, wroot3)
    params["pool1"] = jax.random.uniform(keys[6], (128,), jnp.float32, -1.0, 1.0)
    params["pool2"] = jax.random.uniform(keys[7], (128,), jnp.float32, -1.0, 1.0)
    params["pool3"] = jax.random.uniform(keys[8], (128,), jnp.float32, -1.0, 1.0)
    params["lin1"] = linear(keys[9], 256, 128)
    params["lin2"] = linear(keys[10], 128, 64)
    params["lin3"] = linear(keys[11], 64, 1)
    return params


if __name__ == "__main__":
    key = jax.random.PRNGKey(0)
    k_param, k_x = jax.random.split(key)

    G = 2            # graphs in the batch
    per_graph = 8    # nodes per graph (uniform, contiguous)
    N = G * per_graph
    IN_DIM = 20

    x = jax.random.normal(k_x, (N, IN_DIM), jnp.float32)

    # deterministic edge_index (PyG convention: row 0 = src, row 1 = dst);
    # edges only within each graph -> block-diagonal adjacency.
    edges = []
    for g in range(G):
        base = g * per_graph
        for i in range(per_graph):
            for d in (1, 2):
                src, dst = base + i, base + (i + d) % per_graph
                edges.append((src, dst))
                edges.append((dst, src))
    edge_index = jnp.asarray(edges, dtype=jnp.int32).T
    A = jnp.zeros((N, N), jnp.float32).at[edge_index[1], edge_index[0]].set(1.0)

    params = init_params(k_param)

    fwd = jax.jit(functools.partial(net_forward, num_graphs=G, graphs_per_block=1))
    out = fwd(x, A, params)
    out = jax.block_until_ready(out)
    assert out.shape == (G, 1) and out.dtype == jnp.float32
    assert bool(jnp.all(jnp.isfinite(out)))
    print("KERNEL_OK")
</pallas_src>

<mosaic_0001>
module attributes {stable_mosaic.version = 11 : i64} {
  func.func @_net_block_kernel(%arg0: i32, %arg1: memref<1x8x128xf32, #tpu.memory_space<vmem>>, %arg2: memref<1x8x8xbf16, #tpu.memory_space<vmem>>, %arg3: memref<6x128x128xf32, #tpu.memory_space<vmem>>, %arg4: memref<4x128x128xf32, #tpu.memory_space<vmem>>, %arg5: memref<9x128xf32, #tpu.memory_space<vmem>>, %arg6: memref<1x1x128xf32, #tpu.memory_space<vmem>>) attributes {dimension_semantics = [#tpu.dimension_semantics<parallel>], iteration_bounds = array<i64: 2>, scalar_prefetch = 0 : i64, scratch_operands = 0 : i64, tpu.core_type = #tpu.core_type<tc>, window_params = [{transform_indices = @transform_0, window_bounds = array<i64: 1, 8, 128>}, {transform_indices = @transform_1, window_bounds = array<i64: 1, 8, 8>}, {pipeline_mode = #tpu.pipeline_mode<synchronous>, transform_indices = @transform_2, window_bounds = array<i64: 6, 128, 128>}, {pipeline_mode = #tpu.pipeline_mode<synchronous>, transform_indices = @transform_3, window_bounds = array<i64: 4, 128, 128>}, {pipeline_mode = #tpu.pipeline_mode<synchronous>, transform_indices = @transform_4, window_bounds = array<i64: 9, 128>}, {transform_indices = @transform_5, window_bounds = array<i64: 1, 1, 128>}]} {
    %c0 = arith.constant 0 : index
    %c0_0 = arith.constant 0 : index
    %c0_1 = arith.constant 0 : index
    %0 = vector.load %arg1[%c0, %c0_0, %c0_1] : memref<1x8x128xf32, #tpu.memory_space<vmem>>, vector<1x8x128xf32>
    %1 = vector.shape_cast %0 : vector<1x8x128xf32> to vector<8x128xf32>
    %c0_2 = arith.constant 0 : index
    %c0_3 = arith.constant 0 : index
    %c0_4 = arith.constant 0 : index
    %2 = vector.load %arg2[%c0_2, %c0_3, %c0_4] : memref<1x8x8xbf16, #tpu.memory_space<vmem>>, vector<1x8x8xbf16>
    %3 = vector.shape_cast %2 : vector<1x8x8xbf16> to vector<8x8xbf16>
    %4 = tpu.iota {dimensions = array<i32: 0>} : vector<8x8xi32>
    %5 = tpu.iota {dimensions = array<i32: 1>} : vector<8x8xi32>
    %6 = arith.cmpi slt, %5, %4 : vector<8x8xi32>
    %7 = tpu.iota {dimensions = array<i32: 0>} : vector<8x1xi32>
    %8 = tpu.iota {dimensions = array<i32: 1>} : vector<8x1xi32>
    %c8_i32 = arith.constant 8 : i32
    %9 = vector.broadcast %c8_i32 : i32 to vector<8x1xi32>
    %10 = arith.muli %8, %9 : vector<8x1xi32>
    %11 = arith.cmpi sge, %7, %10 : vector<8x1xi32>
    %c1_i32 = arith.constant 1 : i32
    %12 = vector.broadcast %c1_i32 : i32 to vector<8x1xi32>
    %13 = arith.addi %8, %12 : vector<8x1xi32>
    %c8_i32_5 = arith.constant 8 : i32
    %14 = vector.broadcast %c8_i32_5 : i32 to vector<8x1xi32>
    %15 = arith.muli %13, %14 : vector<8x1xi32>
    %16 = arith.cmpi slt, %7, %15 : vector<8x1xi32>
    %17 = arith.andi %11, %16 : vector<8x1xi1>
    %18 = arith.extui %17 : vector<8x1xi1> to vector<8x1xi32>
    %19 = arith.sitofp %18 : vector<8x1xi32> to vector<8x1xf32>
    %20 = tpu.iota {dimensions = array<i32: 1>} : vector<1x8xi32>
    %21 = tpu.iota {dimensions = array<i32: 0>} : vector<1x8xi32>
    %c8_i32_6 = arith.constant 8 : i32
    %22 = vector.broadcast %c8_i32_6 : i32 to vector<1x8xi32>
    %23 = arith.muli %21, %22 : vector<1x8xi32>
    %24 = arith.cmpi sge, %20, %23 : vector<1x8xi32>
    %c1_i32_7 = arith.constant 1 : i32
    %25 = vector.broadcast %c1_i32_7 : i32 to vector<1x8xi32>
    %26 = arith.addi %21, %25 : vector<1x8xi32>
    %c8_i32_8 = arith.constant 8 : i32
    %27 = vector.broadcast %c8_i32_8 : i32 to vector<1x8xi32>
    %28 = arith.muli %26, %27 : vector<1x8xi32>
    %29 = arith.cmpi slt, %20, %28 : vector<1x8xi32>
    %30 = arith.andi %24, %29 : vector<1x8xi1>
    %31 = arith.extui %30 : vector<1x8xi1> to vector<1x8xi32>
    %32 = arith.sitofp %31 : vector<1x8xi32> to vector<1x8xf32>
    %cst = arith.constant dense<0.000000e+00> : vector<8x8xf32>
    %33 = tpu.matmul %19, %32, %cst {dimension_numbers = #tpu.dot_dimension_numbers<[1], [0], [0], [1], [0, 0, 1, 1], [], []>} : vector<8x1xf32>, vector<1x8xf32>, vector<8x8xf32> -> vector<8x8xf32>
    %cst_9 = arith.constant 1.000000e+00 : f32
    %34 = vector.broadcast %cst_9 : f32 to vector<8x1xf32>
    %cst_10 = arith.constant 1.000000e+00 : f32
    %35 = vector.broadcast %cst_10 : f32 to vector<8x1xf32>
    %36 = arith.truncf %1 : vector<8x128xf32> to vector<8x128xbf16>
    %cst_11 = arith.constant dense<0.000000e+00> : vector<8x128xf32>
    %37 = tpu.matmul %3, %36, %cst_11 {dimension_numbers = #tpu.dot_dimension_numbers<[1], [0], [0], [1], [0, 0, 1, 1], [], []>} : vector<8x8xbf16>, vector<8x128xbf16>, vector<8x128xf32> -> vector<8x128xf32>
    %c0_12 = arith.constant 0 : index
    %c0_13 = arith.constant 0 : index
    %c0_14 = arith.constant 0 : index
    %38 = vector.load %arg3[%c0_12, %c0_13, %c0_14] : memref<6x128x128xf32, #tpu.memory_space<vmem>>, vector<1x128x128xf32>
    %39 = vector.shape_cast %38 : vector<1x128x128xf32> to vector<128x128xf32>
    %cst_15 = arith.constant dense<0.000000e+00> : vector<8x128xf32>
    %40 = tpu.matmul %37, %39, %cst_15 {dimension_numbers = #tpu.dot_dimension_numbers<[1], [0], [0], [1], [0, 0, 1, 1], [], []>} : vector<8x128xf32>, vector<128x128xf32>, vector<8x128xf32> -> vector<8x128xf32>
    %c0_16 = arith.constant 0 : index
    %c0_17 = arith.constant 0 : index
    %41 = vector.load %arg5[%c0_16, %c0_17] : memref<9x128xf32, #tpu.memory_space<vmem>>, vector<1x128xf32>
    %42 = vector.broadcast %41 : vector<1x128xf32> to vector<8x128xf32>
    %43 = arith.addf %40, %42 : vector<8x128xf32>
    %c1 = arith.constant 1 : index
    %c0_18 = arith.constant 0 : index
    %c0_19 = arith.constant 0 : index
    %44 = vector.load %arg3[%c1, %c0_18, %c0_19] : memref<6x128x128xf32, #tpu.memory_space<vmem>>, vector<1x128x128xf32>
    %45 = vector.shape_cast %44 : vector<1x128x128xf32> to vector<128x128xf32>
    %cst_20 = arith.constant dense<0.000000e+00> : vector<8x128xf32>
    %46 = tpu.matmul %1, %45, %cst_20 {dimension_numbers = #tpu.dot_dimension_numbers<[1], [0], [0], [1], [0, 0, 1, 1], [], []>} : vector<8x128xf32>, vector<128x128xf32>, vector<8x128xf32> -> vector<8x128xf32>
    %47 = arith.addf %43, %46 : vector<8x128xf32>
    %cst_21 = arith.constant 0.000000e+00 : f32
    %48 = vector.broadcast %cst_21 : f32 to vector<8x128xf32>
    %49 = arith.maximumf %47, %48 : vector<8x128xf32>
    %c3 = arith.constant 3 : index
    %c0_22 = arith.constant 0 : index
    %50 = vector.load %arg5[%c3, %c0_22] : memref<9x128xf32, #tpu.memory_space<vmem>>, vector<1x128xf32>
    %cst_23 = arith.constant dense<0.000000e+00> : vector<8x1xf32>
    %51 = tpu.matmul %49, %50, %cst_23 {dimension_numbers = #tpu.dot_dimension_numbers<[1], [1], [0], [0], [0, 0, 1, 0], [], []>} : vector<8x128xf32>, vector<1x128xf32>, vector<8x1xf32> -> vector<8x1xf32>
    %52 = math.tanh %51 : vector<8x1xf32>
    %cst_24 = arith.constant 0.000000e+00 : f32
    %53 = vector.broadcast %cst_24 : f32 to vector<8x1xf32>
    %54 = arith.cmpf ogt, %35, %53 : vector<8x1xf32>
    %cst_25 = arith.constant -1.000000e+30 : f32
    %55 = vector.broadcast %cst_25 : f32 to vector<8x1xf32>
    %56 = arith.select %54, %52, %55 : vector<8x1xi1>, vector<8x1xf32>
    %cst_26 = arith.constant dense<0.000000e+00> : vector<8x8xf32>
    %57 = tpu.matmul %34, %56, %cst_26 {dimension_numbers = #tpu.dot_dimension_numbers<[1], [1], [0], [0], [0, 0, 1, 0], [], []>} : vector<8x1xf32>, vector<8x1xf32>, vector<8x8xf32> -> vector<8x8xf32>
    %58 = vector.broadcast %56 : vector<8x1xf32> to vector<8x8xf32>
    %59 = arith.cmpf ogt, %57, %58 : vector<8x8xf32>
    %60 = vector.broadcast %56 : vector<8x1xf32> to vector<8x8xf32>
    %61 = arith.cmpf oeq, %57, %60 : vector<8x8xf32>
    %62 = arith.andi %61, %6 : vector<8x8xi1>
    %63 = arith.ori %59, %62 : vector<8x8xi1>
    %cst_27 = arith.constant 0.000000e+00 : f32
    %64 = vector.broadcast %cst_27 : f32 to vector<8x8xf32>
    %65 = arith.select %63, %33, %64 : vector<8x8xi1>, vector<8x8xf32>
    %cst_28 = arith.constant dense<0.000000e+00> : vector<8xf32>
    %66 = vector.multi_reduction <add>, %65, %cst_28 [1] : vector<8x8xf32> to vector<8xf32>
    %67 = vector.shape_cast %66 : vector<8xf32> to vector<8x1xf32>
    %cst_29 = arith.constant dense<0.000000e+00> : vector<1x1xf32>
    %68 = tpu.matmul %32, %35, %cst_29 {dimension_numbers = #tpu.dot_dimension_numbers<[1], [0], [0], [1], [0, 0, 1, 1], [], []>} : vector<1x8xf32>, vector<8x1xf32>, vector<1x1xf32> -> vector<1x1xf32>
    %cst_30 = arith.constant dense<0.000000e+00> : vector<8x1xf32>
    %69 = tpu.matmul %19, %68, %cst_30 {dimension_numbers = #tpu.dot_dimension_numbers<[1], [0], [0], [1], [0, 0, 1, 1], [], []>} : vector<8x1xf32>, vector<1x1xf32>, vector<8x1xf32> -> vector<8x1xf32>
    %cst_31 = arith.constant 8.000000e-01 : f32
    %70 = vector.broadcast %cst_31 : f32 to vector<8x1xf32>
    %71 = arith.mulf %70, %69 : vector<8x1xf32>
    %72 = math.ceil %71 : vector<8x1xf32>
    %73 = arith.minimumf %72, %69 : vector<8x1xf32>
    %74 = arith.cmpf olt, %67, %73 : vector<8x1xf32>
    %cst_32 = arith.constant 0.000000e+00 : f32
    %75 = vector.broadcast %cst_32 : f32 to vector<8x1xf32>
    %76 = arith.select %74, %35, %75 : vector<8x1xi1>, vector<8x1xf32>
    %77 = vector.broadcast %52 : vector<8x1xf32> to vector<8x128xf32>
    %78 = arith.mulf %49, %77 : vector<8x128xf32>
    %79 = vector.broadcast %76 : vector<8x1xf32> to vector<8x128xf32>
    %80 = arith.mulf %78, %79 : vector<8x128xf32>
    %cst_33 = arith.constant dense<0.000000e+00> : vector<1x1xf32>
    %81 = tpu.matmul %32, %76, %cst_33 {dimension_numbers = #tpu.dot_dimension_numbers<[1], [0], [0], [1], [0, 0, 1, 1], [], []>} : vector<1x8xf32>, vector<8x1xf32>, vector<1x1xf32> -> vector<1x1xf32>
    %cst_34 = arith.constant dense<0.000000e+00> : vector<1x128xf32>
    %82 = tpu.matmul %32, %80, %cst_34 {dimension_numbers = #tpu.dot_dimension_numbers<[1], [0], [0], [1], [0, 0, 1, 1], [], []>} : vector<1x8xf32>, vector<8x128xf32>, vector<1x128xf32> -> vector<1x128xf32>
    %cst_35 = arith.constant 1.000000e+00 : f32
    %83 = vector.broadcast %cst_35 : f32 to vector<1x1xf32>
    %84 = arith.maximumf %81, %83 : vector<1x1xf32>
    %85 = vector.broadcast %84 : vector<1x1xf32> to vector<1x128xf32>
    %86 = arith.divf %82, %85 : vector<1x128xf32>
    %cst_36 = arith.constant 0.000000e+00 : f32
    %87 = vector.broadcast %cst_36 : f32 to vector<8x1xf32>
    %88 = arith.cmpf ogt, %76, %87 : vector<8x1xf32>
    %cst_37 = arith.constant -1.000000e+30 : f32
    %89 = vector.shape_cast %88 : vector<8x1xi1> to vector<8x1xi1>
    %90 = vector.broadcast %89 : vector<8x1xi1> to vector<8x128xi1>
    %91 = vector.broadcast %cst_37 : f32 to vector<8x128xf32>
    %92 = arith.select %90, %80, %91 : vector<8x128xi1>, vector<8x128xf32>
    %93 = vector.shape_cast %92 : vector<8x128xf32> to vector<1x8x128xf32>
    %cst_38 = arith.constant dense<0xFF800000> : vector<1x128xf32>
    %94 = vector.multi_reduction <maximumf>, %93, %cst_38 [1] : vector<1x8x128xf32> to vector<1x128xf32>
    %cst_39 = arith.constant 0.000000e+00 : f32
    %95 = vector.broadcast %cst_39 : f32 to vector<1x1xf32>
    %96 = arith.cmpf ogt, %81, %95 : vector<1x1xf32>
    %cst_40 = arith.constant 0.000000e+00 : f32
    %97 = vector.shape_cast %96 : vector<1x1xi1> to vector<1x1xi1>
    %98 = vector.broadcast %97 : vector<1x1xi1> to vector<1x128xi1>
    %99 = vector.broadcast %cst_40 : f32 to vector<1x128xf32>
    %100 = arith.select %98, %94, %99 : vector<1x128xi1>, vector<1x128xf32>
    %101 = arith.truncf %80 : vector<8x128xf32> to vector<8x128xbf16>
    %cst_41 = arith.constant dense<0.000000e+00> : vector<8x128xf32>
    %102 = tpu.matmul %3, %101, %cst_41 {dimension_numbers = #tpu.dot_dimension_numbers<[1], [0], [0], [1], [0, 0, 1, 1], [], []>} : vector<8x8xbf16>, vector<8x128xbf16>, vector<8x128xf32> -> vector<8x128xf32>
    %c2 = arith.constant 2 : index
    %c0_42 = arith.constant 0 : index
    %c0_43 = arith.constant 0 : index
    %103 = vector.load %arg3[%c2, %c0_42, %c0_43] : memref<6x128x128xf32, #tpu.memory_space<vmem>>, vector<1x128x128xf32>
    %104 = vector.shape_cast %103 : vector<1x128x128xf32> to vector<128x128xf32>
    %cst_44 = arith.constant dense<0.000000e+00> : vector<8x128xf32>
    %105 = tpu.matmul %102, %104, %cst_44 {dimension_numbers = #tpu.dot_dimension_numbers<[1], [0], [0], [1], [0, 0, 1, 1], [], []>} : vector<8x128xf32>, vector<128x128xf32>, vector<8x128xf32> -> vector<8x128xf32>
    %c1_45 = arith.constant 1 : index
    %c0_46 = arith.constant 0 : index
    %106 = vector.load %arg5[%c1_45, %c0_46] : memref<9x128xf32, #tpu.memory_space<vmem>>, vector<1x128xf32>
    %107 = vector.broadcast %106 : vector<1x128xf32> to vector<8x128xf32>
    %108 = arith.addf %105, %107 : vector<8x128xf32>
    %c3_47 = arith.constant 3 : index
    %c0_48 = arith.constant 0 : index
    %c0_49 = arith.constant 0 : index
    %109 = vector.load %arg3[%c3_47, %c0_48, %c0_49] : memref<6x128x128xf32, #tpu.memory_space<vmem>>, vector<1x128x128xf32>
    %110 = vector.shape_cast %109 : vector<1x128x128xf32> to vector<128x128xf32>
    %cst_50 = arith.constant dense<0.000000e+00> : vector<8x128xf32>
    %111 = tpu.matmul %80, %110, %cst_50 {dimension_numbers = #tpu.dot_dimension_numbers<[1], [0], [0], [1], [0, 0, 1, 1], [], []>} : vector<8x128xf32>, vector<128x128xf32>, vector<8x128xf32> -> vector<8x128xf32>
    %112 = arith.addf %108, %111 : vector<8x128xf32>
    %cst_51 = arith.constant 0.000000e+00 : f32
    %113 = vector.broadcast %cst_51 : f32 to vector<8x128xf32>
    %114 = arith.maximumf %112, %113 : vector<8x128xf32>
    %c4 = arith.constant 4 : index
    %c0_52 = arith.constant 0 : index
    %115 = vector.load %arg5[%c4, %c0_52] : memref<9x128xf32, #tpu.memory_space<vmem>>, vector<1x128xf32>
    %cst_53 = arith.constant dense<0.000000e+00> : vector<8x1xf32>
    %116 = tpu.matmul %114, %115, %cst_53 {dimension_numbers = #tpu.dot_dimension_numbers<[1], [1], [0], [0], [0, 0, 1, 0], [], []>} : vector<8x128xf32>, vector<1x128xf32>, vector<8x1xf32> -> vector<8x1xf32>
    %117 = math.tanh %116 : vector<8x1xf32>
    %cst_54 = arith.constant 0.000000e+00 : f32
    %118 = vector.broadcast %cst_54 : f32 to vector<8x1xf32>
    %119 = arith.cmpf ogt, %76, %118 : vector<8x1xf32>
    %cst_55 = arith.constant -1.000000e+30 : f32
    %120 = vector.broadcast %cst_55 : f32 to vector<8x1xf32>
    %121 = arith.select %119, %117, %120 : vector<8x1xi1>, vector<8x1xf32>
    %cst_56 = arith.constant dense<0.000000e+00> : vector<8x8xf32>
    %122 = tpu.matmul %34, %121, %cst_56 {dimension_numbers = #tpu.dot_dimension_numbers<[1], [1], [0], [0], [0, 0, 1, 0], [], []>} : vector<8x1xf32>, vector<8x1xf32>, vector<8x8xf32> -> vector<8x8xf32>
    %123 = vector.broadcast %121 : vector<8x1xf32> to vector<8x8xf32>
    %124 = arith.cmpf ogt, %122, %123 : vector<8x8xf32>
    %125 = vector.broadcast %121 : vector<8x1xf32> to vector<8x8xf32>
    %126 = arith.cmpf oeq, %122, %125 : vector<8x8xf32>
    %127 = arith.andi %126, %6 : vector<8x8xi1>
    %128 = arith.ori %124, %127 : vector<8x8xi1>
    %cst_57 = arith.constant 0.000000e+00 : f32
    %129 = vector.broadcast %cst_57 : f32 to vector<8x8xf32>
    %130 = arith.select %128, %33, %129 : vector<8x8xi1>, vector<8x8xf32>
    %cst_58 = arith.constant dense<0.000000e+00> : vector<8xf32>
    %131 = vector.multi_reduction <add>, %130, %cst_58 [1] : vector<8x8xf32> to vector<8xf32>
    %132 = vector.shape_cast %131 : vector<8xf32> to vector<8x1xf32>
    %cst_59 = arith.constant dense<0.000000e+00> : vector<1x1xf32>
    %133 = tpu.matmul %32, %76, %cst_59 {dimension_numbers = #tpu.dot_dimension_numbers<[1], [0], [0], [1], [0, 0, 1, 1], [], []>} : vector<1x8xf32>, vector<8x1xf32>, vector<1x1xf32> -> vector<1x1xf32>
    %cst_60 = arith.constant dense<0.000000e+00> : vector<8x1xf32>
    %134 = tpu.matmul %19, %133, %cst_60 {dimension_numbers = #tpu.dot_dimension_numbers<[1], [0], [0], [1], [0, 0, 1, 1], [], []>} : vector<8x1xf32>, vector<1x1xf32>, vector<8x1xf32> -> vector<8x1xf32>
    %cst_61 = arith.constant 8.000000e-01 : f32
    %135 = vector.broadcast %cst_61 : f32 to vector<8x1xf32>
    %136 = arith.mulf %135, %134 : vector<8x1xf32>
    %137 = math.ceil %136 : vector<8x1xf32>
    %138 = arith.minimumf %137, %134 : vector<8x1xf32>
    %139 = arith.cmpf olt, %132, %138 : vector<8x1xf32>
    %cst_62 = arith.constant 0.000000e+00 : f32
    %140 = vector.broadcast %cst_62 : f32 to vector<8x1xf32>
    %141 = arith.select %139, %76, %140 : vector<8x1xi1>, vector<8x1xf32>
    %142 = vector.broadcast %117 : vector<8x1xf32> to vector<8x128xf32>
    %143 = arith.mulf %114, %142 : vector<8x128xf32>
    %144 = vector.broadcast %141 : vector<8x1xf32> to vector<8x128xf32>
    %145 = arith.mulf %143, %144 : vector<8x128xf32>
    %cst_63 = arith.constant dense<0.000000e+00> : vector<1x1xf32>
    %146 = tpu.matmul %32, %141, %cst_63 {dimension_numbers = #tpu.dot_dimension_numbers<[1], [0], [0], [1], [0, 0, 1, 1], [], []>} : vector<1x8xf32>, vector<8x1xf32>, vector<1x1xf32> -> vector<1x1xf32>
    %cst_64 = arith.constant dense<0.000000e+00> : vector<1x128xf32>
    %147 = tpu.matmul %32, %145, %cst_64 {dimension_numbers = #tpu.dot_dimension_numbers<[1], [0], [0], [1], [0, 0, 1, 1], [], []>} : vector<1x8xf32>, vector<8x128xf32>, vector<1x128xf32> -> vector<1x128xf32>
    %cst_65 = arith.constant 1.000000e+00 : f32
    %148 = vector.broadcast %cst_65 : f32 to vector<1x1xf32>
    %149 = arith.maximumf %146, %148 : vector<1x1xf32>
    %150 = vector.broadcast %149 : vector<1x1xf32> to vector<1x128xf32>
    %151 = arith.divf %147, %150 : vector<1x128xf32>
    %cst_66 = arith.constant 0.000000e+00 : f32
    %152 = vector.broadcast %cst_66 : f32 to vector<8x1xf32>
    %153 = arith.cmpf ogt, %141, %152 : vector<8x1xf32>
    %cst_67 = arith.constant -1.000000e+30 : f32
    %154 = vector.shape_cast %153 : vector<8x1xi1> to vector<8x1xi1>
    %155 = vector.broadcast %154 : vector<8x1xi1> to vector<8x128xi1>
    %156 = vector.broadcast %cst_67 : f32 to vector<8x128xf32>
    %157 = arith.select %155, %145, %156 : vector<8x128xi1>, vector<8x128xf32>
    %158 = vector.shape_cast %157 : vector<8x128xf32> to vector<1x8x128xf32>
    %cst_68 = arith.constant dense<0xFF800000> : vector<1x128xf32>
    %159 = vector.multi_reduction <maximumf>, %158, %cst_68 [1] : vector<1x8x128xf32> to vector<1x128xf32>
    %cst_69 = arith.constant 0.000000e+00 : f32
    %160 = vector.broadcast %cst_69 : f32 to vector<1x1xf32>
    %161 = arith.cmpf ogt, %146, %160 : vector<1x1xf32>
    %cst_70 = arith.constant 0.000000e+00 : f32
    %162 = vector.shape_cast %161 : vector<1x1xi1> to vector<1x1xi1>
    %163 = vector.broadcast %162 : vector<1x1xi1> to vector<1x128xi1>
    %164 = vector.broadcast %cst_70 : f32 to vector<1x128xf32>
    %165 = arith.select %163, %159, %164 : vector<1x128xi1>, vector<1x128xf32>
    %166 = arith.truncf %145 : vector<8x128xf32> to vector<8x128xbf16>
    %cst_71 = arith.constant dense<0.000000e+00> : vector<8x128xf32>
    %167 = tpu.matmul %3, %166, %cst_71 {dimension_numbers = #tpu.dot_dimension_numbers<[1], [0], [0], [1], [0, 0, 1, 1], [], []>} : vector<8x8xbf16>, vector<8x128xbf16>, vector<8x128xf32> -> vector<8x128xf32>
    %c4_72 = arith.constant 4 : index
    %c0_73 = arith.constant 0 : index
    %c0_74 = arith.constant 0 : index
    %168 = vector.load %arg3[%c4_72, %c0_73, %c0_74] : memref<6x128x128xf32, #tpu.memory_space<vmem>>, vector<1x128x128xf32>
    %169 = vector.shape_cast %168 : vector<1x128x128xf32> to vector<128x128xf32>
    %cst_75 = arith.constant dense<0.000000e+00> : vector<8x128xf32>
    %170 = tpu.matmul %167, %169, %cst_75 {dimension_numbers = #tpu.dot_dimension_numbers<[1], [0], [0], [1], [0, 0, 1, 1], [], []>} : vector<8x128xf32>, vector<128x128xf32>, vector<8x128xf32> -> vector<8x128xf32>
    %c2_76 = arith.constant 2 : index
    %c0_77 = arith.constant 0 : index
    %171 = vector.load %arg5[%c2_76, %c0_77] : memref<9x128xf32, #tpu.memory_space<vmem>>, vector<1x128xf32>
    %172 = vector.broadcast %171 : vector<1x128xf32> to vector<8x128xf32>
    %173 = arith.addf %170, %172 : vector<8x128xf32>
    %c5 = arith.constant 5 : index
    %c0_78 = arith.constant 0 : index
    %c0_79 = arith.constant 0 : index
    %174 = vector.load %arg3[%c5, %c0_78, %c0_79] : memref<6x128x128xf32, #tpu.memory_space<vmem>>, vector<1x128x128xf32>
    %175 = vector.shape_cast %174 : vector<1x128x128xf32> to vector<128x128xf32>
    %cst_80 = arith.constant dense<0.000000e+00> : vector<8x128xf32>
    %176 = tpu.matmul %145, %175, %cst_80 {dimension_numbers = #tpu.dot_dimension_numbers<[1], [0], [0], [1], [0, 0, 1, 1], [], []>} : vector<8x128xf32>, vector<128x128xf32>, vector<8x128xf32> -> vector<8x128xf32>
    %177 = arith.addf %173, %176 : vector<8x128xf32>
    %cst_81 = arith.constant 0.000000e+00 : f32
    %178 = vector.broadcast %cst_81 : f32 to vector<8x128xf32>
    %179 = arith.maximumf %177, %178 : vector<8x128xf32>
    %c5_82 = arith.constant 5 : index
    %c0_83 = arith.constant 0 : index
    %180 = vector.load %arg5[%c5_82, %c0_83] : memref<9x128xf32, #tpu.memory_space<vmem>>, vector<1x128xf32>
    %cst_84 = arith.constant dense<0.000000e+00> : vector<8x1xf32>
    %181 = tpu.matmul %179, %180, %cst_84 {dimension_numbers = #tpu.dot_dimension_numbers<[1], [1], [0], [0], [0, 0, 1, 0], [], []>} : vector<8x128xf32>, vector<1x128xf32>, vector<8x1xf32> -> vector<8x1xf32>
    %182 = math.tanh %181 : vector<8x1xf32>
    %cst_85 = arith.constant 0.000000e+00 : f32
    %183 = vector.broadcast %cst_85 : f32 to vector<8x1xf32>
    %184 = arith.cmpf ogt, %141, %183 : vector<8x1xf32>
    %cst_86 = arith.constant -1.000000e+30 : f32
    %185 = vector.broadcast %cst_86 : f32 to vector<8x1xf32>
    %186 = arith.select %184, %182, %185 : vector<8x1xi1>, vector<8x1xf32>
    %cst_87 = arith.constant dense<0.000000e+00> : vector<8x8xf32>
    %187 = tpu.matmul %34, %186, %cst_87 {dimension_numbers = #tpu.dot_dimension_numbers<[1], [1], [0], [0], [0, 0, 1, 0], [], []>} : vector<8x1xf32>, vector<8x1xf32>, vector<8x8xf32> -> vector<8x8xf32>
    %188 = vector.broadcast %186 : vector<8x1xf32> to vector<8x8xf32>
    %189 = arith.cmpf ogt, %187, %188 : vector<8x8xf32>
    %190 = vector.broadcast %186 : vector<8x1xf32> to vector<8x8xf32>
    %191 = arith.cmpf oeq, %187, %190 : vector<8x8xf32>
    %192 = arith.andi %191, %6 : vector<8x8xi1>
    %193 = arith.ori %189, %192 : vector<8x8xi1>
    %cst_88 = arith.constant 0.000000e+00 : f32
    %194 = vector.broadcast %cst_88 : f32 to vector<8x8xf32>
    %195 = arith.select %193, %33, %194 : vector<8x8xi1>, vector<8x8xf32>
    %cst_89 = arith.constant dense<0.000000e+00> : vector<8xf32>
    %196 = vector.multi_reduction <add>, %195, %cst_89 [1] : vector<8x8xf32> to vector<8xf32>
    %197 = vector.shape_cast %196 : vector<8xf32> to vector<8x1xf32>
    %cst_90 = arith.constant dense<0.000000e+00> : vector<1x1xf32>
    %198 = tpu.matmul %32, %141, %cst_90 {dimension_numbers = #tpu.dot_dimension_numbers<[1], [0], [0], [1], [0, 0, 1, 1], [], []>} : vector<1x8xf32>, vector<8x1xf32>, vector<1x1xf32> -> vector<1x1xf32>
    %cst_91 = arith.constant dense<0.000000e+00> : vector<8x1xf32>
    %199 = tpu.matmul %19, %198, %cst_91 {dimension_numbers = #tpu.dot_dimension_numbers<[1], [0], [0], [1], [0, 0, 1, 1], [], []>} : vector<8x1xf32>, vector<1x1xf32>, vector<8x1xf32> -> vector<8x1xf32>
    %cst_92 = arith.constant 8.000000e-01 : f32
    %200 = vector.broadcast %cst_92 : f32 to vector<8x1xf32>
    %201 = arith.mulf %200, %199 : vector<8x1xf32>
    %202 = math.ceil %201 : vector<8x1xf32>
    %203 = arith.minimumf %202, %199 : vector<8x1xf32>
    %204 = arith.cmpf olt, %197, %203 : vector<8x1xf32>
    %cst_93 = arith.constant 0.000000e+00 : f32
    %205 = vector.broadcast %cst_93 : f32 to vector<8x1xf32>
    %206 = arith.select %204, %141, %205 : vector<8x1xi1>, vector<8x1xf32>
    %207 = vector.broadcast %182 : vector<8x1xf32> to vector<8x128xf32>
    %208 = arith.mulf %179, %207 : vector<8x128xf32>
    %209 = vector.broadcast %206 : vector<8x1xf32> to vector<8x128xf32>
    %210 = arith.mulf %208, %209 : vector<8x128xf32>
    %cst_94 = arith.constant dense<0.000000e+00> : vector<1x1xf32>
    %211 = tpu.matmul %32, %206, %cst_94 {dimension_numbers = #tpu.dot_dimension_numbers<[1], [0], [0], [1], [0, 0, 1, 1], [], []>} : vector<1x8xf32>, vector<8x1xf32>, vector<1x1xf32> -> vector<1x1xf32>
    %cst_95 = arith.constant dense<0.000000e+00> : vector<1x128xf32>
    %212 = tpu.matmul %32, %210, %cst_95 {dimension_numbers = #tpu.dot_dimension_numbers<[1], [0], [0], [1], [0, 0, 1, 1], [], []>} : vector<1x8xf32>, vector<8x128xf32>, vector<1x128xf32> -> vector<1x128xf32>
    %cst_96 = arith.constant 1.000000e+00 : f32
    %213 = vector.broadcast %cst_96 : f32 to vector<1x1xf32>
    %214 = arith.maximumf %211, %213 : vector<1x1xf32>
    %215 = vector.broadcast %214 : vector<1x1xf32> to vector<1x128xf32>
    %216 = arith.divf %212, %215 : vector<1x128xf32>
    %cst_97 = arith.constant 0.000000e+00 : f32
    %217 = vector.broadcast %cst_97 : f32 to vector<8x1xf32>
    %218 = arith.cmpf ogt, %206, %217 : vector<8x1xf32>
    %cst_98 = arith.constant -1.000000e+30 : f32
    %219 = vector.shape_cast %218 : vector<8x1xi1> to vector<8x1xi1>
    %220 = vector.broadcast %219 : vector<8x1xi1> to vector<8x128xi1>
    %221 = vector.broadcast %cst_98 : f32 to vector<8x128xf32>
    %222 = arith.select %220, %210, %221 : vector<8x128xi1>, vector<8x128xf32>
    %223 = vector.shape_cast %222 : vector<8x128xf32> to vector<1x8x128xf32>
    %cst_99 = arith.constant dense<0xFF800000> : vector<1x128xf32>
    %224 = vector.multi_reduction <maximumf>, %223, %cst_99 [1] : vector<1x8x128xf32> to vector<1x128xf32>
    %cst_100 = arith.constant 0.000000e+00 : f32
    %225 = vector.broadcast %cst_100 : f32 to vector<1x1xf32>
    %226 = arith.cmpf ogt, %211, %225 : vector<1x1xf32>
    %cst_101 = arith.constant 0.000000e+00 : f32
    %227 = vector.shape_cast %226 : vector<1x1xi1> to vector<1x1xi1>
    %228 = vector.broadcast %227 : vector<1x1xi1> to vector<1x128xi1>
    %229 = vector.broadcast %cst_101 : f32 to vector<1x128xf32>
    %230 = arith.select %228, %224, %229 : vector<1x128xi1>, vector<1x128xf32>
    %231 = arith.addf %100, %165 : vector<1x128xf32>
    %232 = arith.addf %231, %230 : vector<1x128xf32>
    %233 = arith.addf %86, %151 : vector<1x128xf32>
    %234 = arith.addf %233, %216 : vector<1x128xf32>
    %c0_102 = arith.constant 0 : index
    %c0_103 = arith.constant 0 : index
    %c0_104 = arith.constant 0 : index
    %235 = vector.load %arg4[%c0_102, %c0_103, %c0_104] : memref<4x128x128xf32, #tpu.memory_space<vmem>>, vector<1x128x128xf32>
    %236 = vector.shape_cast %235 : vector<1x128x128xf32> to vector<128x128xf32>
    %cst_105 = arith.constant dense<0.000000e+00> : vector<1x128xf32>
    %237 = tpu.matmul %232, %236, %cst_105 {dimension_numbers = #tpu.dot_dimension_numbers<[1], [0], [0], [1], [0, 0, 1, 1], [], []>} : vector<1x128xf32>, vector<128x128xf32>, vector<1x128xf32> -> vector<1x128xf32>
    %c1_106 = arith.constant 1 : index
    %c0_107 = arith.constant 0 : index
    %c0_108 = arith.constant 0 : index
    %238 = vector.load %arg4[%c1_106, %c0_107, %c0_108] : memref<4x128x128xf32, #tpu.memory_space<vmem>>, vector<1x128x128xf32>
    %239 = vector.shape_cast %238 : vector<1x128x128xf32> to vector<128x128xf32>
    %cst_109 = arith.constant dense<0.000000e+00> : vector<1x128xf32>
    %240 = tpu.matmul %234, %239, %cst_109 {dimension_numbers = #tpu.dot_dimension_numbers<[1], [0], [0], [1], [0, 0, 1, 1], [], []>} : vector<1x128xf32>, vector<128x128xf32>, vector<1x128xf32> -> vector<1x128xf32>
    %241 = arith.addf %237, %240 : vector<1x128xf32>
    %c6 = arith.constant 6 : index
    %c0_110 = arith.constant 0 : index
    %242 = vector.load %arg5[%c6, %c0_110] : memref<9x128xf32, #tpu.memory_space<vmem>>, vector<1x128xf32>
    %243 = arith.addf %241, %242 : vector<1x128xf32>
    %cst_111 = arith.constant 0.000000e+00 : f32
    %244 = vector.broadcast %cst_111 : f32 to vector<1x128xf32>
    %245 = arith.maximumf %243, %244 : vector<1x128xf32>
    %c2_112 = arith.constant 2 : index
    %c0_113 = arith.constant 0 : index
    %c0_114 = arith.constant 0 : index
    %246 = vector.load %arg4[%c2_112, %c0_113, %c0_114] : memref<4x128x128xf32, #tpu.memory_space<vmem>>, vector<1x128x128xf32>
    %247 = vector.shape_cast %246 : vector<1x128x128xf32> to vector<128x128xf32>
    %cst_115 = arith.constant dense<0.000000e+00> : vector<1x128xf32>
    %248 = tpu.matmul %245, %247, %cst_115 {dimension_numbers = #tpu.dot_dimension_numbers<[1], [0], [0], [1], [0, 0, 1, 1], [], []>} : vector<1x128xf32>, vector<128x128xf32>, vector<1x128xf32> -> vector<1x128xf32>
    %c7 = arith.constant 7 : index
    %c0_116 = arith.constant 0 : index
    %249 = vector.load %arg5[%c7, %c0_116] : memref<9x128xf32, #tpu.memory_space<vmem>>, vector<1x128xf32>
    %250 = arith.addf %248, %249 : vector<1x128xf32>
    %cst_117 = arith.constant 0.000000e+00 : f32
    %251 = vector.broadcast %cst_117 : f32 to vector<1x128xf32>
    %252 = arith.maximumf %250, %251 : vector<1x128xf32>
    %c3_118 = arith.constant 3 : index
    %c0_119 = arith.constant 0 : index
    %c0_120 = arith.constant 0 : index
    %253 = vector.load %arg4[%c3_118, %c0_119, %c0_120] : memref<4x128x128xf32, #tpu.memory_space<vmem>>, vector<1x128x128xf32>
    %254 = vector.shape_cast %253 : vector<1x128x128xf32> to vector<128x128xf32>
    %cst_121 = arith.constant dense<0.000000e+00> : vector<1x128xf32>
    %255 = tpu.matmul %252, %254, %cst_121 {dimension_numbers = #tpu.dot_dimension_numbers<[1], [0], [0], [1], [0, 0, 1, 1], [], []>} : vector<1x128xf32>, vector<128x128xf32>, vector<1x128xf32> -> vector<1x128xf32>
    %c8 = arith.constant 8 : index
    %c0_122 = arith.constant 0 : index
    %256 = vector.load %arg5[%c8, %c0_122] : memref<9x128xf32, #tpu.memory_space<vmem>>, vector<1x128xf32>
    %257 = arith.addf %255, %256 : vector<1x128xf32>
    %c0_123 = arith.constant 0 : index
    %c0_124 = arith.constant 0 : index
    %c0_125 = arith.constant 0 : index
    %258 = vector.load %arg6[%c0_123, %c0_124, %c0_125] : memref<1x1x128xf32, #tpu.memory_space<vmem>>, vector<1x1x128xf32>
    %259 = vector.shape_cast %258 : vector<1x1x128xf32> to vector<1x128xf32>
    %260 = vector.shape_cast %257 : vector<1x128xf32> to vector<1x1x128xf32>
    tpu.vector_store %arg6[%c0_123, %c0_124, %c0_125], %260 {strides = array<i32>} : memref<1x1x128xf32, #tpu.memory_space<vmem>>, vector<1x1x128xf32>,
    return
  }
  func.func @transform_0(%arg0: i32) -> (i32, i32, i32) {
    %c0_i32 = arith.constant 0 : i32
    %c0_i32_0 = arith.constant 0 : i32
    %c0_i32_1 = arith.constant 0 : i32
    return %arg0, %c0_i32, %c0_i32_0 : i32, i32, i32
  }
  func.func @transform_1(%arg0: i32) -> (i32, i32, i32) {
    %c0_i32 = arith.constant 0 : i32
    %c0_i32_0 = arith.constant 0 : i32
    %c0_i32_1 = arith.constant 0 : i32
    return %arg0, %c0_i32, %c0_i32_0 : i32, i32, i32
  }
  func.func @transform_2(%arg0: i32) -> (i32, i32, i32) {
    %c0_i32 = arith.constant 0 : i32
    %c0_i32_0 = arith.constant 0 : i32
    %c0_i32_1 = arith.constant 0 : i32
    %c0_i32_2 = arith.constant 0 : i32
    return %c0_i32, %c0_i32_0, %c0_i32_1 : i32, i32, i32
  }
  func.func @transform_3(%arg0: i32) -> (i32, i32, i32) {
    %c0_i32 = arith.constant 0 : i32
    %c0_i32_0 = arith.constant 0 : i32
    %c0_i32_1 = arith.constant 0 : i32
    %c0_i32_2 = arith.constant 0 : i32
    return %c0_i32, %c0_i32_0, %c0_i32_1 : i32, i32, i32
  }
  func.func @transform_4(%arg0: i32) -> (i32, i32) {
    %c0_i32 = arith.constant 0 : i32
    %c0_i32_0 = arith.constant 0 : i32
    %c0_i32_1 = arith.constant 0 : i32
    return %c0_i32, %c0_i32_0 : i32, i32
  }
  func.func @transform_5(%arg0: i32) -> (i32, i32, i32) {
    %c0_i32 = arith.constant 0 : i32
    %c0_i32_0 = arith.constant 0 : i32
    %c0_i32_1 = arith.constant 0 : i32
    return %arg0, %c0_i32, %c0_i32_0 : i32, i32, i32
  }
}

</mosaic_0001>

<llo_original>
// kernel: net_forward.1
$region0: #{net_forward.1}
  #allocation0 [shape = 'u32[]', space=smem, size = 0x4, offset = 0x4, fixed_abs, tag = 'smem constant byte address 0x4 - core index']
  #allocation1 [shape = 'u32[72,128]{1,0:T(1,128)}', space=vmem, size = 0x9000, scoped, tag = 'internal scratch']
  %s0 = inlined_call_operand.vmem [shape: f32[2,8,128], index: 0, kind: input, shape index: {}]
  %s1 = inlined_call_operand.vmem [shape: bf16[2,8,8], index: 1, kind: input, shape index: {}]
  %s2 = inlined_call_operand.vmem [shape: f32[6,128,128], index: 2, kind: input, shape index: {}]
  %s3 = inlined_call_operand.vmem [shape: f32[4,128,128], index: 3, kind: input, shape index: {}]
  %s4 = inlined_call_operand.vmem [shape: f32[9,128], index: 4, kind: input, shape index: {}]
  %s5 = inlined_call_operand.vmem [shape: f32[2,1,128], index: 5, kind: output, shape index: {}]
  %s6 = sld [smem:[#allocation0]]
  $region53: #{net_forward.1} parent=0
    _
  %s8 = ssub.s32 1, %s6
  %s9 = scalar_select 0, %s8, %s6
  loop: start=0, step=1, limit=4
  $region2: #{net_forward.1} parent=0 // loop_pre_header
    _
  $region3: #{net_forward.1} parent=0 // loop_header
    %s11 = sphi 0, %s15
    %p12 = scmp.ge.s32.totalorder %s11, 4
    %s21 = sphi 0, %s23
    %s24 = sphi 0, %s21
    %s25 = sphi 0, %s24
    %s41 = sphi 0, %s25
    %s47 = sphi 0, %s49
    %s50 = sphi 0, %s47
    %s51 = sphi 0, %s50
    %s67 = sphi 0, %s51
    %s71 = sphi 0, %s71
    %s73 = sphi 0, %s71
    %s74 = sphi 0, %s73
    %s88 = sphi 0, %s74
    %s92 = sphi 0, %s92
    %s94 = sphi 0, %s92
    %s95 = sphi 0, %s94
    %s109 = sphi 0, %s95
    %s113 = sphi 0, %s113
    %s115 = sphi 0, %s113
    %s116 = sphi 0, %s115
    %s130 = sphi 0, %s116
    %s136 = sphi 0, %s138
    %s139 = sphi 0, %s136
    %s140 = sphi 0, %s139
    %s156 = sphi 0, %s140
  $region4: #{net_forward.1} parent=0 // loop_header_branch
    %14 = sbr.rel (%p12) target = $region8
  $region5: #{net_forward.1} parent=0 // loop_body
    %s16 = ssub.s32 %s11, 1
    %s17 = ssub.s32 %s11, 2
    %s18 = sadd.s32 %s11, 1
    %s19 = ssub.s32 %s11, %s18
    %p20 = scmp.eq.s32.totalorder %s19, 0
    %s22 = sadd.s32 %s21, 1
    %s23 = scalar_select %p20, %s21, %s22
    %p26 = pneg %p20
    %p27 = scmp.eq.s32.totalorder %s11, 1
    %p28 = por %p26, %p27
    %p29 = scmp.ne.s32.totalorder %s21, %s24
    %p30 = scmp.eq.s32.totalorder %s11, 0
    %p31 = por %p29, %p30
    %p32 = scmp.ne.s32.totalorder %s21, %s24
    %p33 = scmp.eq.s32.totalorder %s16, 1
    %p34 = por %p32, %p33
    %p35 = scmp.ne.s32.totalorder %s24, %s25
    %p36 = scmp.eq.s32.totalorder %s16, 0
    %p37 = por %p35, %p36
    %p38 = scmp.ne.s32.totalorder %s24, %s25
    %p39 = scmp.eq.s32.totalorder %s17, 1
    %p40 = por %p38, %p39
    %p42 = scmp.ne.s32.totalorder %s25, %s41
    %p43 = scmp.eq.s32.totalorder %s17, 0
    %p44 = por %p42, %p43
    %s45 = ssub.s32 %s11, %s18
    %p46 = scmp.eq.s32.totalorder %s45, 0
    %s48 = sadd.s32 %s47, 1
    %s49 = scalar_select %p46, %s47, %s48
    %p52 = pneg %p46
    %p53 = scmp.eq.s32.totalorder %s11, 1
    %p54 = por %p52, %p53
    %p55 = scmp.ne.s32.totalorder %s47, %s50
    %p56 = scmp.eq.s32.totalorder %s11, 0
    %p57 = por %p55, %p56
    %p58 = scmp.ne.s32.totalorder %s47, %s50
    %p59 = scmp.eq.s32.totalorder %s16, 1
    %p60 = por %p58, %p59
    %p61 = scmp.ne.s32.totalorder %s50, %s51
    %p62 = scmp.eq.s32.totalorder %s16, 0
    %p63 = por %p61, %p62
    %p64 = scmp.ne.s32.totalorder %s50, %s51
    %p65 = scmp.eq.s32.totalorder %s17, 1
    %p66 = por %p64, %p65
    %p68 = scmp.ne.s32.totalorder %s51, %s67
    %p69 = scmp.eq.s32.totalorder %s17, 0
    %p70 = por %p68, %p69
    %s72 = sadd.s32 %s71, 1
    %p75 = scmp.eq.s32.totalorder %s11, 1
    %p76 = scmp.ne.s32.totalorder %s71, %s73
    %p77 = scmp.eq.s32.totalorder %s11, 0
    %p78 = por %p76, %p77
    %p79 = scmp.ne.s32.totalorder %s71, %s73
    %p80 = scmp.eq.s32.totalorder %s16, 1
    %p81 = por %p79, %p80
    %p82 = scmp.ne.s32.totalorder %s73, %s74
    %p83 = scmp.eq.s32.totalorder %s16, 0
    %p84 = por %p82, %p83
    %p85 = scmp.ne.s32.totalorder %s73, %s74
    %p86 = scmp.eq.s32.totalorder %s17, 1
    %p87 = por %p85, %p86
    %p89 = scmp.ne.s32.totalorder %s74, %s88
    %p90 = scmp.eq.s32.totalorder %s17, 0
    %p91 = por %p89, %p90
    %s93 = sadd.s32 %s92, 1
    %p96 = scmp.eq.s32.totalorder %s11, 1
    %p97 = scmp.ne.s32.totalorder %s92, %s94
    %p98 = scmp.eq.s32.totalorder %s11, 0
    %p99 = por %p97, %p98
    %p100 = scmp.ne.s32.totalorder %s92, %s94
    %p101 = scmp.eq.s32.totalorder %s16, 1
    %p102 = por %p100, %p101
    %p103 = scmp.ne.s32.totalorder %s94, %s95
    %p104 = scmp.eq.s32.totalorder %s16, 0
    %p105 = por %p103, %p104
    %p106 = scmp.ne.s32.totalorder %s94, %s95
    %p107 = scmp.eq.s32.totalorder %s17, 1
    %p108 = por %p106, %p107
    %p110 = scmp.ne.s32.totalorder %s95, %s109
    %p111 = scmp.eq.s32.totalorder %s17, 0
    %p112 = por %p110, %p111
    %s114 = sadd.s32 %s113, 1
    %p117 = scmp.eq.s32.totalorder %s11, 1
    %p118 = scmp.ne.s32.totalorder %s113, %s115
    %p119 = scmp.eq.s32.totalorder %s11, 0
    %p120 = por %p118, %p119
    %p121 = scmp.ne.s32.totalorder %s113, %s115
    %p122 = scmp.eq.s32.totalorder %s16, 1
    %p123 = por %p121, %p122
    %p124 = scmp.ne.s32.totalorder %s115, %s116
    %p125 = scmp.eq.s32.totalorder %s16, 0
    %p126 = por %p124, %p125
    %p127 = scmp.ne.s32.totalorder %s115, %s116
    %p128 = scmp.eq.s32.totalorder %s17, 1
    %p129 = por %p127, %p128
    %p131 = scmp.ne.s32.totalorder %s116, %s130
    %p132 = scmp.eq.s32.totalorder %s17, 0
    %p133 = por %p131, %p132
    %s134 = ssub.s32 %s11, %s18
    %p135 = scmp.eq.s32.totalorder %s134, 0
    %s137 = sadd.s32 %s136, 1
    %s138 = scalar_select %p135, %s136, %s137
    %p141 = pneg %p135
    %p142 = scmp.eq.s32.totalorder %s11, 1
    %p143 = por %p141, %p142
    %p144 = scmp.ne.s32.totalorder %s136, %s139
    %p145 = scmp.eq.s32.totalorder %s11, 0
    %p146 = por %p144, %p145
    %p147 = scmp.ne.s32.totalorder %s136, %s139
    %p148 = scmp.eq.s32.totalorder %s16, 1
    %p149 = por %p147, %p148
    %p150 = scmp.ne.s32.totalorder %s139, %s140
    %p151 = scmp.eq.s32.totalorder %s16, 0
    %p152 = por %p150, %p151
    %p153 = scmp.ne.s32.totalorder %s139, %s140
    %p154 = scmp.eq.s32.totalorder %s17, 1
    %p155 = por %p153, %p154
    %p157 = scmp.ne.s32.totalorder %s140, %s156
    %p158 = scmp.eq.s32.totalorder %s17, 0
    %p159 = por %p157, %p158
    %p160 = scmp.le.s32.totalorder 1, %s11
    %p161 = scmp.lt.s32.totalorder %s11, 3
    %p162 = pnand %p160, %p161
    %p163 = pneg %p162
    // Predicated region
    $region9: #{net_forward.1} parent=5 // pred_check
      _
    $region10: #{net_forward.1} parent=5 // pred_check_branch
      %165 = sbr.rel (%p162) target = $region12
    $region11: #{net_forward.1} parent=5 // pred_region
      %s166 = ssub.s32 %s11, 1
      // Predicated region
      $region13: #{net_forward.1} parent=11 // pred_check
        %p167 = pneg %p84
      $region14: #{net_forward.1} parent=11 // pred_check_branch
        %169 = sbr.rel (%p167) target = $region16
      $region15: #{net_forward.1} parent=11 // pred_region
        _
      $region16: #{net_forward.1} parent=11 // pred_fallthru
        _
      // Predicated region
      $region17: #{net_forward.1} parent=11 // pred_check
        %p170 = pneg %p105
      $region18: #{net_forward.1} parent=11 // pred_check_branch
        %172 = sbr.rel (%p170) target = $region20
      $region19: #{net_forward.1} parent=11 // pred_region
        _
      $region20: #{net_forward.1} parent=11 // pred_fallthru
        _
      // Predicated region
      $region21: #{net_forward.1} parent=11 // pred_check
        %p173 = pneg %p126
      $region22: #{net_forward.1} parent=11 // pred_check_branch
        %175 = sbr.rel (%p173) target = $region24
      $region23: #{net_forward.1} parent=11 // pred_region
        _
      $region24: #{net_forward.1} parent=11 // pred_fallthru
        _
    $region12: #{net_forward.1} parent=5 // pred_fallthru
      _
    %p176 = scmp.lt.s32.totalorder %s11, 2
    // Predicated region
    $region25: #{net_forward.1} parent=5 // pred_check
      %p177 = pneg %p176
    $region26: #{net_forward.1} parent=5 // pred_check_branch
      %179 = sbr.rel (%p177) target = $region28
    $region27: #{net_forward.1} parent=5 // pred_region
      // Predicated region
      $region29: #{net_forward.1} parent=27 // pred_check
        %p180 = pneg %p31
      $region30: #{net_forward.1} parent=27 // pred_check_branch
        %182 = sbr.rel (%p180) target = $region32
      $region31: #{net_forward.1} parent=27 // pred_region
        %p183 = scmp.lt.s32.totalorder %s11, 1
        %s184 = scalar_select %p183, %s11, 1
        %s185 = smul.addr %s184, 8
        %s186 = scalar_lea.vmem %s0, %s185
      $region32: #{net_forward.1} parent=27 // pred_fallthru
        _
      // Predicated region
      $region33: #{net_forward.1} parent=27 // pred_check
        %p187 = pneg %p57
      $region34: #{net_forward.1} parent=27 // pred_check_branch
        %189 = sbr.rel (%p187) target = $region36
      $region35: #{net_forward.1} parent=27 // pred_region
        %p190 = scmp.lt.s32.totalorder %s11, 1
        %s191 = scalar_select %p190, %s11, 1
        %s192 = smul.addr %s191, 4
        %s193 = scalar_lea.vmem %s1, %s192
      $region36: #{net_forward.1} parent=27 // pred_fallthru
        _
    $region28: #{net_forward.1} parent=5 // pred_fallthru
      _
    %p194 = scmp.le.s32.totalorder 1, %s11
    %p195 = scmp.lt.s32.totalorder %s11, 3
    %p196 = pnand %p194, %p195
    %p197 = pneg %p196
    // Predicated region
    $region37: #{net_forward.1} parent=5 // pred_check
      _
    $region38: #{net_forward.1} parent=5 // pred_check_branch
      %199 = sbr.rel (%p196) target = $region40
    $region39: #{net_forward.1} parent=5 // pred_region
      %s200 = ssub.s32 %s11, 1
      %p201 = scmp.lt.s32.totalorder %s16, 1
      %s202 = scalar_select %p201, %s16, 1
      %s203 = smul.addr %s202, 8
      %s204 = scalar_lea.vmem %s0, %s203
      %p205 = pneg %p37
      %p206 = pneg %p34
      %p207 = scmp.lt.s32.totalorder %s16, 1
      %s208 = scalar_select %p207, %s16, 1
      %s209 = smul.addr %s208, 4
      %s210 = scalar_lea.vmem %s1, %s209
      %p211 = pneg %p63
      %p212 = pneg %p60
      %p213 = pneg %p84
      %p214 = pneg %p81
      %p215 = pneg %p105
      %p216 = pneg %p102
      %p217 = pneg %p126
      %p218 = pneg %p123
      %p219 = pneg %p152
      %p220 = pneg %p149
      %p221 = scmp.lt.s32.totalorder %s16, 1
      %s222 = scalar_select %p221, %s16, 1
      %s223 = scalar_lea.vmem %s5, %s222
      %p224 = scmp.lt.s32.totalorder %s16, 1
      %s225 = scalar_select %p224, %s16, 1
      %s226 = smul.addr %s225, 8
      %s227 = scalar_lea.vmem %s0, %s226
      %p228 = scmp.lt.s32.totalorder %s16, 1
      %s229 = scalar_select %p228, %s16, 1
      %s230 = smul.addr %s229, 4
      %s231 = scalar_lea.vmem %s1, %s230
      %p232 = scmp.lt.s32.totalorder %s16, 1
      %s233 = scalar_select %p232, %s16, 1
      %s234 = scalar_lea.vmem %s5, %s233
      %v236 = vld [vmem:[%s227] sm:$0xff]
      %v237 = vld [vmem:[%s231] sm:$0xf]
      %v238 = vlaneseq
      %v239 = vshrl.u32 %v238, 7
      %v240 = vlaneseq
      %v241 = vand.u32 %v240, 127
      %vm242 = vcmp.lt.s32.totalorder %v241, %v239
      %v243 = vmul.u32 %v241, 8
      %vm244 = vcmp.ge.s32.totalorder %v239, %v243
      %v245 = vadd.s32 %v241, 1
      %v246 = vmul.u32 %v245, 8
      %vm247 = vcmp.lt.s32.totalorder %v239, %v246
      %vm248 = vmand %vm244, %vm247
      %v249 = vsel %vm248, 1, 0
      %v250 = vcvt.s32.f32 %v249
      %v251 = vmul.u32 %v239, 8
      %vm252 = vcmp.ge.s32.totalorder %v241, %v251
      %v253 = vadd.s32 %v239, 1
      %v254 = vmul.u32 %v253, 8
      %vm255 = vcmp.lt.s32.totalorder %v241, %v254
      %vm256 = vmand %vm252, %vm255
      %v257 = vsel %vm256, 1, 0
      %v258 = vcvt.s32.f32 %v257
      %vm259 = vcmask 7168
      %v261 = vsel %vm259, %v250, 0
      %vm263 = vcmask 1040384
      %v265 = vsel %vm263, %v258, 0
      %267 = vmatpush.msra.mxu0 0.0
      %268 = vmatpush.msra.mxu0 0.0
      %269 = vmatpush.msra.mxu0 0.0
      %270 = vmatpush.msra.mxu0 0.0
      %271 = vmatpush.msra.mxu0 0.0
      %272 = vmatpush.msra.mxu0 0.0
      %273 = vmatpush.msra.mxu0 0.0
      %274 = vmatpush.msra.mxu0 0.0
      %275 = vmatpush.msra.mxu0 0.0
      %276 = vmatpush.msra.mxu0 0.0
      %277 = vmatpush.msra.mxu0 0.0
      %278 = vmatpush.msra.mxu0 0.0
      %279 = vmatpush.msra.mxu0 0.0
      %280 = vmatpush.msra.mxu0 0.0
      %281 = vmatpush.msra.mxu0 0.0
      %282 = vmatpush.msra.mxu0 %v265
      %283 = vmatmul.f32.gmra.mxu0 %v261
      %v284 = vpop.f32.mrf.mxu0
      %v285 = vadd.f32 0.0, %v284
      %286 = vdwg.mxu0
      %v287 = vpack.c.bf16 %v236, %v236
      %vm288 = vcmask 64512
      %v290 = vsel %vm288, %v237, 0
      %vm292 = vcmask 1043456
      %v294 = vsel %vm292, %v287, 0
      %296 = vmatpush.bf16.msra.mxu0 0
      %297 = vmatpush.bf16.msra.mxu0 0
      %298 = vmatpush.bf16.msra.mxu0 0
      %299 = vmatpush.bf16.msra.mxu0 0
      %300 = vmatpush.bf16.msra.mxu0 0
      %301 = vmatpush.bf16.msra.mxu0 0
      %302 = vmatpush.bf16.msra.mxu0 0
      %303 = vmatpush.bf16.msra.mxu0 %v294
      %304 = vmatmul.bf16.gmra.mxu0 %v290
      %v305 = vpop.f32.mrf.mxu0
      %v306 = vadd.f32 0.0, %v305
      %v307 = vpop.f32.mrf.mxu0
      %308 = vdwg.mxu0
      %v309 = vld [vmem:[%s2] sm:$0xff]
      %v310 = vld [vmem:[%s2 + $0x8] sm:$0xff]
      %v311 = vld [vmem:[%s2 + $0x10] sm:$0xff]
      %v312 = vld [vmem:[%s2 + $0x18] sm:$0xff]
      %v313 = vld [vmem:[%s2 + $0x20] sm:$0xff]
      %v314 = vld [vmem:[%s2 + $0x28] sm:$0xff]
      %v315 = vld [vmem:[%s2 + $0x30] sm:$0xff]
      %v316 = vld [vmem:[%s2 + $0x38] sm:$0xff]
      %v317 = vld [vmem:[%s2 + $0x40] sm:$0xff]
      %v318 = vld [vmem:[%s2 + $0x48] sm:$0xff]
      %v319 = vld [vmem:[%s2 + $0x50] sm:$0xff]
      %v320 = vld [vmem:[%s2 + $0x58] sm:$0xff]
      %v321 = vld [vmem:[%s2 + $0x60] sm:$0xff]
      %v322 = vld [vmem:[%s2 + $0x68] sm:$0xff]
      %v323 = vld [vmem:[%s2 + $0x70] sm:$0xff]
      %v324 = vld [vmem:[%s2 + $0x78] sm:$0xff]
      %v325 = vld [vmem:[%s4] sm:$0x1]
      %v326 = vperm.slane %v325, 0
      %327 = vmatpush.msra.mxu0 %v324
      %328 = vmatpush.msra.mxu0 %v323
      %329 = vmatpush.msra.mxu0 %v322
      %330 = vmatpush.msra.mxu0 %v321
      %331 = vmatpush.msra.mxu0 %v320
      %332 = vmatpush.msra.mxu0 %v319
      %333 = vmatpush.msra.mxu0 %v318
      %334 = vmatpush.msra.mxu0 %v317
      %335 = vmatpush.msra.mxu0 %v316
      %336 = vmatpush.msra.mxu0 %v315
      %337 = vmatpush.msra.mxu0 %v314
      %338 = vmatpush.msra.mxu0 %v313
      %339 = vmatpush.msra.mxu0 %v312
      %340 = vmatpush.msra.mxu0 %v311
      %341 = vmatpush.msra.mxu0 %v310
      %342 = vmatpush.msra.mxu0 %v309
      %343 = vmatmul.f32.gmra.mxu0 %v306
      %v344 = vpop.f32.mrf.mxu0
      %v345 = vadd.f32 %v326, %v344
      %346 = vdwg.mxu0
      %s347 = scalar_lea.vmem %s2, 128
      %v348 = vld [vmem:[%s347] sm:$0xff]
      %v349 = vld [vmem:[%s347 + $0x8] sm:$0xff]
      %v350 = vld [vmem:[%s347 + $0x10] sm:$0xff]
      %v351 = vld [vmem:[%s347 + $0x18] sm:$0xff]
      %v352 = vld [vmem:[%s347 + $0x20] sm:$0xff]
      %v353 = vld [vmem:[%s347 + $0x28] sm:$0xff]
      %v354 = vld [vmem:[%s347 + $0x30] sm:$0xff]
      %v355 = vld [vmem:[%s347 + $0x38] sm:$0xff]
      %v356 = vld [vmem:[%s347 + $0x40] sm:$0xff]
      %v357 = vld [vmem:[%s347 + $0x48] sm:$0xff]
      %v358 = vld [vmem:[%s347 + $0x50] sm:$0xff]
      %v359 = vld [vmem:[%s347 + $0x58] sm:$0xff]
      %v360 = vld [vmem:[%s347 + $0x60] sm:$0xff]
      %v361 = vld [vmem:[%s347 + $0x68] sm:$0xff]
      %v362 = vld [vmem:[%s347 + $0x70] sm:$0xff]
      %v363 = vld [vmem:[%s347 + $0x78] sm:$0xff]
      %364 = vmatpush.msra.mxu0 %v363
      %365 = vmatpush.msra.mxu0 %v362
      %366 = vmatpush.msra.mxu0 %v361
      %367 = vmatpush.msra.mxu0 %v360
      %368 = vmatpush.msra.mxu0 %v359
      %369 = vmatpush.msra.mxu0 %v358
      %370 = vmatpush.msra.mxu0 %v357
      %371 = vmatpush.msra.mxu0 %v356
      %372 = vmatpush.msra.mxu0 %v355
      %373 = vmatpush.msra.mxu0 %v354
      %374 = vmatpush.msra.mxu0 %v353
      %375 = vmatpush.msra.mxu0 %v352
      %376 = vmatpush.msra.mxu0 %v351
      %377 = vmatpush.msra.mxu0 %v350
      %378 = vmatpush.msra.mxu0 %v349
      %379 = vmatpush.msra.mxu0 %v348
      %380 = vmatmul.f32.gmra.mxu0 %v236
      %v381 = vpop.f32.mrf.mxu0
      %v382 = vadd.f32 0.0, %v381
      %383 = vdwg.mxu0
      %v384 = vadd.f32 %v345, %v382
      %v385 = vmax.f32 %v384, 0.0
      %v386 = vld [vmem:[%s4 + $0x3] sm:$0x1]
      %v387 = vperm.slane %v386, 0
      %v388 = vmul.f32 %v385, %v387
      %389 = vadd.xlane.f32.xlu0 %v388
      %v390 = vpop.xlane.xlu0 %389
      %v391 = vtanh.pop %v390
      %vm392 = vcmp.gt.f32.partialorder 1.0, 0.0
      %v393 = vsel %vm392, %v391, -1e+30
      %v395 = vsel %vm259, 1.0, 0
      %v398 = vsel %vm259, %v393, 0
      %400 = vmatpush.xpose.msra.mxu0 0.0
      %401 = vmatpush.xpose.msra.mxu0 0.0
      %402 = vmatpush.xpose.msra.mxu0 0.0
      %403 = vmatpush.xpose.msra.mxu0 0.0
      %404 = vmatpush.xpose.msra.mxu0 0.0
      %405 = vmatpush.xpose.msra.mxu0 0.0
      %406 = vmatpush.xpose.msra.mxu0 0.0
      %407 = vmatpush.xpose.msra.mxu0 0.0
      %408 = vmatpush.xpose.msra.mxu0 0.0
      %409 = vmatpush.xpose.msra.mxu0 0.0
      %410 = vmatpush.xpose.msra.mxu0 0.0
      %411 = vmatpush.xpose.msra.mxu0 0.0
      %412 = vmatpush.xpose.msra.mxu0 0.0
      %413 = vmatpush.xpose.msra.mxu0 0.0
      %414 = vmatpush.xpose.msra.mxu0 0.0
      %415 = vmatpush.xpose.msra.mxu0 %v398
      %416 = vmatmul.f32.gmra.mxu0 %v395
      %v417 = vpop.f32.mrf.mxu0
      %v418 = vadd.f32 0.0, %v417
      %419 = vdwg.mxu0
      %vm420 = vcmp.gt.f32.partialorder %v418, %v393
      %vm421 = vcmp.eq.f32.partialorder %v418, %v393
      %vm422 = vmand %vm421, %vm242
      %vm423 = vmor %vm420, %vm422
      %v424 = vsel %vm423, %v285, 0.0
      %v425 = vsel %vm288, %v424, 0.0
      %426 = vadd.xlane.f32.xlu0 %v425
      %v427 = vpop.xlane.xlu0 %426
      %v428 = vsel %vm288, %v258, 0
      %430 = vmatpush.msra.mxu0 0.0
      %431 = vmatpush.msra.mxu0 0.0
      %432 = vmatpush.msra.mxu0 0.0
      %433 = vmatpush.msra.mxu0 0.0
      %434 = vmatpush.msra.mxu0 0.0
      %435 = vmatpush.msra.mxu0 0.0
      %436 = vmatpush.msra.mxu0 0.0
      %437 = vmatpush.msra.mxu0 0.0
      %438 = vmatpush.msra.mxu0 0.0
      %439 = vmatpush.msra.mxu0 0.0
      %440 = vmatpush.msra.mxu0 0.0
      %441 = vmatpush.msra.mxu0 0.0
      %442 = vmatpush.msra.mxu0 0.0
      %443 = vmatpush.msra.mxu0 0.0
      %444 = vmatpush.msra.mxu0 0.0
      %445 = vmatpush.msra.mxu0 1.0
      %446 = vmatmul.f32.gmra.mxu0 %v428
      %v447 = vpop.f32.mrf.mxu0
      %v448 = vadd.f32 0.0, %v447
      %449 = vdwg.mxu0
      %v451 = vsel %vm263, %v448, 0
      %453 = vmatpush.msra.mxu0 0.0
      %454 = vmatpush.msra.mxu0 0.0
      %455 = vmatpush.msra.mxu0 0.0
      %456 = vmatpush.msra.mxu0 0.0
      %457 = vmatpush.msra.mxu0 0.0
      %458 = vmatpush.msra.mxu0 0.0
      %459 = vmatpush.msra.mxu0 0.0
      %460 = vmatpush.msra.mxu0 0.0
      %461 = vmatpush.msra.mxu0 0.0
      %462 = vmatpush.msra.mxu0 0.0
      %463 = vmatpush.msra.mxu0 0.0
      %464 = vmatpush.msra.mxu0 0.0
      %465 = vmatpush.msra.mxu0 0.0
      %466 = vmatpush.msra.mxu0 0.0
      %467 = vmatpush.msra.mxu0 0.0
      %468 = vmatpush.msra.mxu0 %v451
      %469 = vmatmul.f32.gmra.mxu0 %v261
      %v470 = vpop.f32.mrf.mxu0
      %v471 = vadd.f32 0.0, %v470
      %472 = vdwg.mxu0
      %v473 = vmul.f32 %v471, 0.8
      %v474 = vceil.f32 %v473
      %v475 = vmin.f32 %v474, %v471
      %vm476 = vcmp.lt.f32.partialorder %v427, %v475
      %v477 = vsel %vm476, 1.0, 0.0
      %v478 = vmul.f32 %v385, %v391
      %480 = vset.pattern.permute.xlu0 0
      %481 = vperm.xlu0 %480, %v477
      %v482 = vpop.permute.xlu0 %481
      %v484 = vmul.f32 %v478, %v482
      %485 = vmatpush.msra.mxu0 0.0
      %486 = vmatpush.msra.mxu0 0.0
      %487 = vmatpush.msra.mxu0 0.0
      %488 = vmatpush.msra.mxu0 0.0
      %489 = vmatpush.msra.mxu0 0.0
      %490 = vmatpush.msra.mxu0 0.0
      %491 = vmatpush.msra.mxu0 0.0
      %492 = vmatpush.msra.mxu0 0.0
      %493 = vmatpush.msra.mxu0 0.0
      %494 = vmatpush.msra.mxu0 0.0
      %495 = vmatpush.msra.mxu0 0.0
      %496 = vmatpush.msra.mxu0 0.0
      %497 = vmatpush.msra.mxu0 0.0
      %498 = vmatpush.msra.mxu0 0.0
      %499 = vmatpush.msra.mxu0 0.0
      %500 = vmatpush.msra.mxu0 %v477
      %501 = vmatmul.f32.gmra.mxu0 %v428
      %v502 = vpop.f32.mrf.mxu0
      %v503 = vadd.f32 0.0, %v502
      %504 = vdwg.mxu0
      %505 = vmatpush.msra.mxu0 0.0
      %506 = vmatpush.msra.mxu0 0.0
      %507 = vmatpush.msra.mxu0 0.0
      %508 = vmatpush.msra.mxu0 0.0
      %509 = vmatpush.msra.mxu0 0.0
      %510 = vmatpush.msra.mxu0 0.0
      %511 = vmatpush.msra.mxu0 0.0
      %512 = vmatpush.msra.mxu0 0.0
      %513 = vmatpush.msra.mxu0 0.0
      %514 = vmatpush.msra.mxu0 0.0
      %515 = vmatpush.msra.mxu0 0.0
      %516 = vmatpush.msra.mxu0 0.0
      %517 = vmatpush.msra.mxu0 0.0
      %518 = vmatpush.msra.mxu0 0.0
      %519 = vmatpush.msra.mxu0 0.0
      %520 = vmatpush.msra.mxu0 %v484
      %521 = vmatmul.f32.gmra.mxu0 %v428
      %v522 = vpop.f32.mrf.mxu0
      %v523 = vadd.f32 0.0, %v522
      %524 = vdwg.mxu0
      %v525 = vmax.f32 %v503, 1.0
      %527 = vset.pattern.permute.xlu0 0
      %528 = vperm.xlu0 %527, %v525
      %v529 = vpop.permute.xlu0 %528
      %v531 = vrcp.pop %v529
      %v532 = vmul.f32 %v529, %v531
      %v533 = vsub.f32 1.0, %v532
      %v534 = vmul.f32 %v531, %v533
      %v535 = vadd.f32 %v531, %v534
      %vm536 = vweird.f32 %v529
      %vm537 = vweird.f32 %v531
      %vm538 = vmor %vm536, %vm537
      %v539 = vsel %vm538, %v531, %v535
      %v540 = vand.u32 2147483647, %v529
      %vm541 = vcmp.eq.f32.partialorder %v540, 8.507059e+37
      %v542 = vand.u32 %v529, 2147483648
      %v543 = vor.u32 1.1754944e-38, %v542
      %v544 = vsel %vm541, %v543, %v539
      %v545 = vmul.f32 %v523, %v544
      %vm546 = vcmp.gt.f32.partialorder %v477, 0.0
      %v547 = vsel %vm546, 1, 0
      %548 = vset.pattern.permute.xlu0 0
      %549 = vperm.xlu0 %548, %v547
      %v550 = vpop.permute.xlu0 %549
      %vm551 = vcmp.eq.s32.totalorder %v550, 1
      %v552 = vsel %vm551, %v484, -1e+30
      %v553 = vrot.slane %v552, 4
      %v554 = vmax.f32 %v552, %v553
      %v555 = vrot.slane %v554, 2
      %v556 = vmax.f32 %v554, %v555
      %v557 = vrot.slane %v556, 1
      %v558 = vmax.f32 %v556, %v557
      %vm559 = vcmp.gt.f32.partialorder %v503, 0.0
      %v560 = vsel %vm559, 1, 0
      %561 = vset.pattern.permute.xlu0 0
      %562 = vperm.xlu0 %561, %v560
      %v563 = vpop.permute.xlu0 %562
      %vm564 = vcmp.eq.s32.totalorder %v563, 1
      %v565 = vsel %vm564, %v558, 0.0
      %v566 = vpack.c.bf16 %v484, %v484
      %v568 = vsel %vm292, %v566, 0
      %570 = vmatpush.bf16.msra.mxu0 0
      %571 = vmatpush.bf16.msra.mxu0 0
      %572 = vmatpush.bf16.msra.mxu0 0
      %573 = vmatpush.bf16.msra.mxu0 0
      %574 = vmatpush.bf16.msra.mxu0 0
      %575 = vmatpush.bf16.msra.mxu0 0
      %576 = vmatpush.bf16.msra.mxu0 0
      %577 = vmatpush.bf16.msra.mxu0 %v568
      %578 = vmatmul.bf16.gmra.mxu0 %v290
      %v579 = vpop.f32.mrf.mxu0
      %v580 = vadd.f32 0.0, %v579
      %v581 = vpop.f32.mrf.mxu0
      %582 = vdwg.mxu0
      %s583 = scalar_lea.vmem %s2, 256
      %v584 = vld [vmem:[%s583] sm:$0xff]
      %v585 = vld [vmem:[%s583 + $0x8] sm:$0xff]
      %v586 = vld [vmem:[%s583 + $0x10] sm:$0xff]
      %v587 = vld [vmem:[%s583 + $0x18] sm:$0xff]
      %v588 = vld [vmem:[%s583 + $0x20] sm:$0xff]
      %v589 = vld [vmem:[%s583 + $0x28] sm:$0xff]
      %v590 = vld [vmem:[%s583 + $0x30] sm:$0xff]
      %v591 = vld [vmem:[%s583 + $0x38] sm:$0xff]
      %v592 = vld [vmem:[%s583 + $0x40] sm:$0xff]
      %v593 = vld [vmem:[%s583 + $0x48] sm:$0xff]
      %v594 = vld [vmem:[%s583 + $0x50] sm:$0xff]
      %v595 = vld [vmem:[%s583 + $0x58] sm:$0xff]
      %v596 = vld [vmem:[%s583 + $0x60] sm:$0xff]
      %v597 = vld [vmem:[%s583 + $0x68] sm:$0xff]
      %v598 = vld [vmem:[%s583 + $0x70] sm:$0xff]
      %v599 = vld [vmem:[%s583 + $0x78] sm:$0xff]
      %v600 = vld [vmem:[%s4 + $0x1] sm:$0x1]
      %v601 = vperm.slane %v600, 0
      %602 = vmatpush.msra.mxu0 %v599
      %603 = vmatpush.msra.mxu0 %v598
      %604 = vmatpush.msra.mxu0 %v597
      %605 = vmatpush.msra.mxu0 %v596
      %606 = vmatpush.msra.mxu0 %v595
      %607 = vmatpush.msra.mxu0 %v594
      %608 = vmatpush.msra.mxu0 %v593
      %609 = vmatpush.msra.mxu0 %v592
      %610 = vmatpush.msra.mxu0 %v591
      %611 = vmatpush.msra.mxu0 %v590
      %612 = vmatpush.msra.mxu0 %v589
      %613 = vmatpush.msra.mxu0 %v588
      %614 = vmatpush.msra.mxu0 %v587
      %615 = vmatpush.msra.mxu0 %v586
      %616 = vmatpush.msra.mxu0 %v585
      %617 = vmatpush.msra.mxu0 %v584
      %618 = vmatmul.f32.gmra.mxu0 %v580
      %v619 = vpop.f32.mrf.mxu0
      %v620 = vadd.f32 %v601, %v619
      %621 = vdwg.mxu0
      %s622 = scalar_lea.vmem %s2, 384
      %v623 = vld [vmem:[%s622] sm:$0xff]
      %v624 = vld [vmem:[%s622 + $0x8] sm:$0xff]
      %v625 = vld [vmem:[%s622 + $0x10] sm:$0xff]
      %v626 = vld [vmem:[%s622 + $0x18] sm:$0xff]
      %v627 = vld [vmem:[%s622 + $0x20] sm:$0xff]
      %v628 = vld [vmem:[%s622 + $0x28] sm:$0xff]
      %v629 = vld [vmem:[%s622 + $0x30] sm:$0xff]
      %v630 = vld [vmem:[%s622 + $0x38] sm:$0xff]
      %v631 = vld [vmem:[%s622 + $0x40] sm:$0xff]
      %v632 = vld [vmem:[%s622 + $0x48] sm:$0xff]
      %v633 = vld [vmem:[%s622 + $0x50] sm:$0xff]
      %v634 = vld [vmem:[%s622 + $0x58] sm:$0xff]
      %v635 = vld [vmem:[%s622 + $0x60] sm:$0xff]
      %v636 = vld [vmem:[%s622 + $0x68] sm:$0xff]
      %v637 = vld [vmem:[%s622 + $0x70] sm:$0xff]
      %v638 = vld [vmem:[%s622 + $0x78] sm:$0xff]
      %639 = vmatpush.msra.mxu0 %v638
      %640 = vmatpush.msra.mxu0 %v637
      %641 = vmatpush.msra.mxu0 %v636
      %642 = vmatpush.msra.mxu0 %v635
      %643 = vmatpush.msra.mxu0 %v634
      %644 = vmatpush.msra.mxu0 %v633
      %645 = vmatpush.msra.mxu0 %v632
      %646 = vmatpush.msra.mxu0 %v631
      %647 = vmatpush.msra.mxu0 %v630
      %648 = vmatpush.msra.mxu0 %v629
      %649 = vmatpush.msra.mxu0 %v628
      %650 = vmatpush.msra.mxu0 %v627
      %651 = vmatpush.msra.mxu0 %v626
      %652 = vmatpush.msra.mxu0 %v625
      %653 = vmatpush.msra.mxu0 %v624
      %654 = vmatpush.msra.mxu0 %v623
      %655 = vmatmul.f32.gmra.mxu0 %v484
      %v656 = vpop.f32.mrf.mxu0
      %v657 = vadd.f32 0.0, %v656
      %658 = vdwg.mxu0
      %v659 = vadd.f32 %v620, %v657
      %v660 = vmax.f32 %v659, 0.0
      %v661 = vld [vmem:[%s4 + $0x4] sm:$0x1]
      %v662 = vperm.slane %v661, 0
      %v663 = vmul.f32 %v660, %v662
      %664 = vadd.xlane.f32.xlu0 %v663
      %v665 = vpop.xlane.xlu0 %664
      %v666 = vtanh.pop %v665
      %v667 = vsel %vm546, %v666, -1e+30
      %v669 = vsel %vm259, %v667, 0
      %671 = vmatpush.xpose.msra.mxu0 0.0
      %672 = vmatpush.xpose.msra.mxu0 0.0
      %673 = vmatpush.xpose.msra.mxu0 0.0
      %674 = vmatpush.xpose.msra.mxu0 0.0
      %675 = vmatpush.xpose.msra.mxu0 0.0
      %676 = vmatpush.xpose.msra.mxu0 0.0
      %677 = vmatpush.xpose.msra.mxu0 0.0
      %678 = vmatpush.xpose.msra.mxu0 0.0
      %679 = vmatpush.xpose.msra.mxu0 0.0
      %680 = vmatpush.xpose.msra.mxu0 0.0
      %681 = vmatpush.xpose.msra.mxu0 0.0
      %682 = vmatpush.xpose.msra.mxu0 0.0
      %683 = vmatpush.xpose.msra.mxu0 0.0
      %684 = vmatpush.xpose.msra.mxu0 0.0
      %685 = vmatpush.xpose.msra.mxu0 0.0
      %686 = vmatpush.xpose.msra.mxu0 %v669
      %687 = vmatmul.f32.gmra.mxu0 %v395
      %v688 = vpop.f32.mrf.mxu0
      %v689 = vadd.f32 0.0, %v688
      %690 = vdwg.mxu0
      %691 = vset.pattern.permute.xlu0 0
      %692 = vperm.xlu0 %691, %v667
      %v693 = vpop.permute.xlu0 %692
      %vm695 = vcmp.gt.f32.partialorder %v689, %v693
      %vm696 = vcmp.eq.f32.partialorder %v689, %v693
      %vm697 = vmand %vm696, %vm242
      %vm698 = vmor %vm695, %vm697
      %v699 = vsel %vm698, %v285, 0.0
      %v700 = vsel %vm288, %v699, 0.0
      %701 = vadd.xlane.f32.xlu0 %v700
      %v702 = vpop.xlane.xlu0 %701
      %v704 = vsel %vm263, %v503, 0
      %706 = vmatpush.msra.mxu0 0.0
      %707 = vmatpush.msra.mxu0 0.0
      %708 = vmatpush.msra.mxu0 0.0
      %709 = vmatpush.msra.mxu0 0.0
      %710 = vmatpush.msra.mxu0 0.0
      %711 = vmatpush.msra.mxu0 0.0
      %712 = vmatpush.msra.mxu0 0.0
      %713 = vmatpush.msra.mxu0 0.0
      %714 = vmatpush.msra.mxu0 0.0
      %715 = vmatpush.msra.mxu0 0.0
      %716 = vmatpush.msra.mxu0 0.0
      %717 = vmatpush.msra.mxu0 0.0
      %718 = vmatpush.msra.mxu0 0.0
      %719 = vmatpush.msra.mxu0 0.0
      %720 = vmatpush.msra.mxu0 0.0
      %721 = vmatpush.msra.mxu0 %v704
      %722 = vmatmul.f32.gmra.mxu0 %v261
      %v723 = vpop.f32.mrf.mxu0
      %v724 = vadd.f32 0.0, %v723
      %725 = vdwg.mxu0
      %v726 = vmul.f32 %v724, 0.8
      %v727 = vceil.f32 %v726
      %v728 = vmin.f32 %v727, %v724
      %vm729 = vcmp.lt.f32.partialorder %v702, %v728
      %v730 = vsel %vm729, %v477, 0.0
      %v731 = vmul.f32 %v660, %v666
      %733 = vset.pattern.permute.xlu0 0
      %734 = vperm.xlu0 %733, %v730
      %v735 = vpop.permute.xlu0 %734
      %v737 = vmul.f32 %v731, %v735
      %738 = vmatpush.msra.mxu0 0.0
      %739 = vmatpush.msra.mxu0 0.0
      %740 = vmatpush.msra.mxu0 0.0
      %741 = vmatpush.msra.mxu0 0.0
      %742 = vmatpush.msra.mxu0 0.0
      %743 = vmatpush.msra.mxu0 0.0
      %744 = vmatpush.msra.mxu0 0.0
      %745 = vmatpush.msra.mxu0 0.0
      %746 = vmatpush.msra.mxu0 0.0
      %747 = vmatpush.msra.mxu0 0.0
      %748 = vmatpush.msra.mxu0 0.0
      %749 = vmatpush.msra.mxu0 0.0
      %750 = vmatpush.msra.mxu0 0.0
      %751 = vmatpush.msra.mxu0 0.0
      %752 = vmatpush.msra.mxu0 0.0
      %753 = vmatpush.msra.mxu0 %v730
      %754 = vmatmul.f32.gmra.mxu0 %v428
      %v755 = vpop.f32.mrf.mxu0
      %v756 = vadd.f32 0.0, %v755
      %757 = vdwg.mxu0
      %758 = vmatpush.msra.mxu0 0.0
      %759 = vmatpush.msra.mxu0 0.0
      %760 = vmatpush.msra.mxu0 0.0
      %761 = vmatpush.msra.mxu0 0.0
      %762 = vmatpush.msra.mxu0 0.0
      %763 = vmatpush.msra.mxu0 0.0
      %764 = vmatpush.msra.mxu0 0.0
      %765 = vmatpush.msra.mxu0 0.0
      %766 = vmatpush.msra.mxu0 0.0
      %767 = vmatpush.msra.mxu0 0.0
      %768 = vmatpush.msra.mxu0 0.0
      %769 = vmatpush.msra.mxu0 0.0
      %770 = vmatpush.msra.mxu0 0.0
      %771 = vmatpush.msra.mxu0 0.0
      %772 = vmatpush.msra.mxu0 0.0
      %773 = vmatpush.msra.mxu0 %v737
      %774 = vmatmul.f32.gmra.mxu0 %v428
      %v775 = vpop.f32.mrf.mxu0
      %v776 = vadd.f32 0.0, %v775
      %777 = vdwg.mxu0
      %v778 = vmax.f32 %v756, 1.0
      %780 = vset.pattern.permute.xlu0 0
      %781 = vperm.xlu0 %780, %v778
      %v782 = vpop.permute.xlu0 %781
      %v784 = vrcp.pop %v782
      %v785 = vmul.f32 %v782, %v784
      %v786 = vsub.f32 1.0, %v785
      %v787 = vmul.f32 %v784, %v786
      %v788 = vadd.f32 %v784, %v787
      %vm789 = vweird.f32 %v782
      %vm790 = vweird.f32 %v784
      %vm791 = vmor %vm789, %vm790
      %v792 = vsel %vm791, %v784, %v788
      %v793 = vand.u32 2147483647, %v782
      %vm794 = vcmp.eq.f32.partialorder %v793, 8.507059e+37
      %v795 = vand.u32 %v782, 2147483648
      %v796 = vor.u32 1.1754944e-38, %v795
      %v797 = vsel %vm794, %v796, %v792
      %v798 = vmul.f32 %v776, %v797
      %vm799 = vcmp.gt.f32.partialorder %v730, 0.0
      %v800 = vsel %vm799, 1, 0
      %801 = vset.pattern.permute.xlu0 0
      %802 = vperm.xlu0 %801, %v800
      %v803 = vpop.permute.xlu0 %802
      %vm804 = vcmp.eq.s32.totalorder %v803, 1
      %v805 = vsel %vm804, %v737, -1e+30
      %v806 = vrot.slane %v805, 4
      %v807 = vmax.f32 %v805, %v806
      %v808 = vrot.slane %v807, 2
      %v809 = vmax.f32 %v807, %v808
      %v810 = vrot.slane %v809, 1
      %v811 = vmax.f32 %v809, %v810
      %vm812 = vcmp.gt.f32.partialorder %v756, 0.0
      %v813 = vsel %vm812, 1, 0
      %814 = vset.pattern.permute.xlu0 0
      %815 = vperm.xlu0 %814, %v813
      %v816 = vpop.permute.xlu0 %815
      %vm817 = vcmp.eq.s32.totalorder %v816, 1
      %v818 = vsel %vm817, %v811, 0.0
      %v819 = vpack.c.bf16 %v737, %v737
      %v821 = vsel %vm292, %v819, 0
      %823 = vmatpush.bf16.msra.mxu0 0
      %824 = vmatpush.bf16.msra.mxu0 0
      %825 = vmatpush.bf16.msra.mxu0 0
      %826 = vmatpush.bf16.msra.mxu0 0
      %827 = vmatpush.bf16.msra.mxu0 0
      %828 = vmatpush.bf16.msra.mxu0 0
      %829 = vmatpush.bf16.msra.mxu0 0
      %830 = vmatpush.bf16.msra.mxu0 %v821
      %831 = vmatmul.bf16.gmra.mxu0 %v290
      %v832 = vpop.f32.mrf.mxu0
      %v833 = vadd.f32 0.0, %v832
      %v834 = vpop.f32.mrf.mxu0
      %835 = vdwg.mxu0
      %s836 = scalar_lea.vmem %s2, 512
      %v837 = vld [vmem:[%s836] sm:$0xff]
      %v838 = vld [vmem:[%s836 + $0x8] sm:$0xff]
      %v839 = vld [vmem:[%s836 + $0x10] sm:$0xff]
      %v840 = vld [vmem:[%s836 + $0x18] sm:$0xff]
      %v841 = vld [vmem:[%s836 + $0x20] sm:$0xff]
      %v842 = vld [vmem:[%s836 + $0x28] sm:$0xff]
      %v843 = vld [vmem:[%s836 + $0x30] sm:$0xff]
      %v844 = vld [vmem:[%s836 + $0x38] sm:$0xff]
      %v845 = vld [vmem:[%s836 + $0x40] sm:$0xff]
      %v846 = vld [vmem:[%s836 + $0x48] sm:$0xff]
      %v847 = vld [vmem:[%s836 + $0x50] sm:$0xff]
      %v848 = vld [vmem:[%s836 + $0x58] sm:$0xff]
      %v849 = vld [vmem:[%s836 + $0x60] sm:$0xff]
      %v850 = vld [vmem:[%s836 + $0x68] sm:$0xff]
      %v851 = vld [vmem:[%s836 + $0x70] sm:$0xff]
      %v852 = vld [vmem:[%s836 + $0x78] sm:$0xff]
      %v853 = vld [vmem:[%s4 + $0x2] sm:$0x1]
      %v854 = vperm.slane %v853, 0
      %855 = vmatpush.msra.mxu0 %v852
      %856 = vmatpush.msra.mxu0 %v851
      %857 = vmatpush.msra.mxu0 %v850
      %858 = vmatpush.msra.mxu0 %v849
      %859 = vmatpush.msra.mxu0 %v848
      %860 = vmatpush.msra.mxu0 %v847
      %861 = vmatpush.msra.mxu0 %v846
      %862 = vmatpush.msra.mxu0 %v845
      %863 = vmatpush.msra.mxu0 %v844
      %864 = vmatpush.msra.mxu0 %v843
      %865 = vmatpush.msra.mxu0 %v842
      %866 = vmatpush.msra.mxu0 %v841
      %867 = vmatpush.msra.mxu0 %v840
      %868 = vmatpush.msra.mxu0 %v839
      %869 = vmatpush.msra.mxu0 %v838
      %870 = vmatpush.msra.mxu0 %v837
      %871 = vmatmul.f32.gmra.mxu0 %v833
      %v872 = vpop.f32.mrf.mxu0
      %v873 = vadd.f32 %v854, %v872
      %874 = vdwg.mxu0
      %s875 = scalar_lea.vmem %s2, 640
      %v876 = vld [vmem:[%s875] sm:$0xff]
      %v877 = vld [vmem:[%s875 + $0x8] sm:$0xff]
      %v878 = vld [vmem:[%s875 + $0x10] sm:$0xff]
      %v879 = vld [vmem:[%s875 + $0x18] sm:$0xff]
      %v880 = vld [vmem:[%s875 + $0x20] sm:$0xff]
      %v881 = vld [vmem:[%s875 + $0x28] sm:$0xff]
      %v882 = vld [vmem:[%s875 + $0x30] sm:$0xff]
      %v883 = vld [vmem:[%s875 + $0x38] sm:$0xff]
      %v884 = vld [vmem:[%s875 + $0x40] sm:$0xff]
      %v885 = vld [vmem:[%s875 + $0x48] sm:$0xff]
      %v886 = vld [vmem:[%s875 + $0x50] sm:$0xff]
      %v887 = vld [vmem:[%s875 + $0x58] sm:$0xff]
      %v888 = vld [vmem:[%s875 + $0x60] sm:$0xff]
      %v889 = vld [vmem:[%s875 + $0x68] sm:$0xff]
      %v890 = vld [vmem:[%s875 + $0x70] sm:$0xff]
      %v891 = vld [vmem:[%s875 + $0x78] sm:$0xff]
      %892 = vmatpush.msra.mxu0 %v891
      %893 = vmatpush.msra.mxu0 %v890
      %894 = vmatpush.msra.mxu0 %v889
      %895 = vmatpush.msra.mxu0 %v888
      %896 = vmatpush.msra.mxu0 %v887
      %897 = vmatpush.msra.mxu0 %v886
      %898 = vmatpush.msra.mxu0 %v885
      %899 = vmatpush.msra.mxu0 %v884
      %900 = vmatpush.msra.mxu0 %v883
      %901 = vmatpush.msra.mxu0 %v882
      %902 = vmatpush.msra.mxu0 %v881
      %903 = vmatpush.msra.mxu0 %v880
      %904 = vmatpush.msra.mxu0 %v879
      %905 = vmatpush.msra.mxu0 %v878
      %906 = vmatpush.msra.mxu0 %v877
      %907 = vmatpush.msra.mxu0 %v876
      %908 = vmatmul.f32.gmra.mxu0 %v737
      %v909 = vpop.f32.mrf.mxu0
      %v910 = vadd.f32 0.0, %v909
      %911 = vdwg.mxu0
      %v912 = vadd.f32 %v873, %v910
      %v913 = vmax.f32 %v912, 0.0
      %v914 = vld [vmem:[%s4 + $0x5] sm:$0x1]
      %v915 = vperm.slane %v914, 0
      %v916 = vmul.f32 %v913, %v915
      %917 = vadd.xlane.f32.xlu0 %v916
      %v918 = vpop.xlane.xlu0 %917
      %v919 = vtanh.pop %v918
      %v920 = vsel %vm799, %v919, -1e+30
      %v922 = vsel %vm259, %v920, 0
      %924 = vmatpush.xpose.msra.mxu0 0.0
      %925 = vmatpush.xpose.msra.mxu0 0.0
      %926 = vmatpush.xpose.msra.mxu0 0.0
      %927 = vmatpush.xpose.msra.mxu0 0.0
      %928 = vmatpush.xpose.msra.mxu0 0.0
      %929 = vmatpush.xpose.msra.mxu0 0.0
      %930 = vmatpush.xpose.msra.mxu0 0.0
      %931 = vmatpush.xpose.msra.mxu0 0.0
      %932 = vmatpush.xpose.msra.mxu0 0.0
      %933 = vmatpush.xpose.msra.mxu0 0.0
      %934 = vmatpush.xpose.msra.mxu0 0.0
      %935 = vmatpush.xpose.msra.mxu0 0.0
      %936 = vmatpush.xpose.msra.mxu0 0.0
      %937 = vmatpush.xpose.msra.mxu0 0.0
      %938 = vmatpush.xpose.msra.mxu0 0.0
      %939 = vmatpush.xpose.msra.mxu0 %v922
      %940 = vmatmul.f32.gmra.mxu0 %v395
      %v941 = vpop.f32.mrf.mxu0
      %v942 = vadd.f32 0.0, %v941
      %943 = vdwg.mxu0
      %944 = vset.pattern.permute.xlu0 0
      %945 = vperm.xlu0 %944, %v920
      %v946 = vpop.permute.xlu0 %945
      %vm948 = vcmp.gt.f32.partialorder %v942, %v946
      %vm949 = vcmp.eq.f32.partialorder %v942, %v946
      %vm950 = vmand %vm949, %vm242
      %vm951 = vmor %vm948, %vm950
      %v952 = vsel %vm951, %v285, 0.0
      %v953 = vsel %vm288, %v952, 0.0
      %954 = vadd.xlane.f32.xlu0 %v953
      %v955 = vpop.xlane.xlu0 %954
      %v957 = vsel %vm263, %v756, 0
      %959 = vmatpush.msra.mxu0 0.0
      %960 = vmatpush.msra.mxu0 0.0
      %961 = vmatpush.msra.mxu0 0.0
      %962 = vmatpush.msra.mxu0 0.0
      %963 = vmatpush.msra.mxu0 0.0
      %964 = vmatpush.msra.mxu0 0.0
      %965 = vmatpush.msra.mxu0 0.0
      %966 = vmatpush.msra.mxu0 0.0
      %967 = vmatpush.msra.mxu0 0.0
      %968 = vmatpush.msra.mxu0 0.0
      %969 = vmatpush.msra.mxu0 0.0
      %970 = vmatpush.msra.mxu0 0.0
      %971 = vmatpush.msra.mxu0 0.0
      %972 = vmatpush.msra.mxu0 0.0
      %973 = vmatpush.msra.mxu0 0.0
      %974 = vmatpush.msra.mxu0 %v957
      %975 = vmatmul.f32.gmra.mxu0 %v261
      %v976 = vpop.f32.mrf.mxu0
      %v977 = vadd.f32 0.0, %v976
      %978 = vdwg.mxu0
      %v979 = vmul.f32 %v977, 0.8
      %v980 = vceil.f32 %v979
      %v981 = vmin.f32 %v980, %v977
      %vm982 = vcmp.lt.f32.partialorder %v955, %v981
      %v983 = vsel %vm982, %v730, 0.0
      %v984 = vmul.f32 %v913, %v919
      %986 = vset.pattern.permute.xlu0 0
      %987 = vperm.xlu0 %986, %v983
      %v988 = vpop.permute.xlu0 %987
      %v990 = vmul.f32 %v984, %v988
      %991 = vmatpush.msra.mxu0 0.0
      %992 = vmatpush.msra.mxu0 0.0
      %993 = vmatpush.msra.mxu0 0.0
      %994 = vmatpush.msra.mxu0 0.0
      %995 = vmatpush.msra.mxu0 0.0
      %996 = vmatpush.msra.mxu0 0.0
      %997 = vmatpush.msra.mxu0 0.0
      %998 = vmatpush.msra.mxu0 0.0
      %999 = vmatpush.msra.mxu0 0.0
      %1000 = vmatpush.msra.mxu0 0.0
      %1001 = vmatpush.msra.mxu0 0.0
      %1002 = vmatpush.msra.mxu0 0.0
      %1003 = vmatpush.msra.mxu0 0.0
      %1004 = vmatpush.msra.mxu0 0.0
      %1005 = vmatpush.msra.mxu0 0.0
      %1006 = vmatpush.msra.mxu0 %v983
      %1007 = vmatmul.f32.gmra.mxu0 %v428
      %v1008 = vpop.f32.mrf.mxu0
      %v1009 = vadd.f32 0.0, %v1008
      %1010 = vdwg.mxu0
      %1011 = vmatpush.msra.mxu0 0.0
      %1012 = vmatpush.msra.mxu0 0.0
      %1013 = vmatpush.msra.mxu0 0.0
      %1014 = vmatpush.msra.mxu0 0.0
      %1015 = vmatpush.msra.mxu0 0.0
      %1016 = vmatpush.msra.mxu0 0.0
      %1017 = vmatpush.msra.mxu0 0.0
      %1018 = vmatpush.msra.mxu0 0.0
      %1019 = vmatpush.msra.mxu0 0.0
      %1020 = vmatpush.msra.mxu0 0.0
      %1021 = vmatpush.msra.mxu0 0.0
      %1022 = vmatpush.msra.mxu0 0.0
      %1023 = vmatpush.msra.mxu0 0.0
      %1024 = vmatpush.msra.mxu0 0.0
      %1025 = vmatpush.msra.mxu0 0.0
      %1026 = vmatpush.msra.mxu0 %v990
      %1027 = vmatmul.f32.gmra.mxu0 %v428
      %v1028 = vpop.f32.mrf.mxu0
      %v1029 = vadd.f32 0.0, %v1028
      %1030 = vdwg.mxu0
      %v1031 = vmax.f32 %v1009, 1.0
      %1033 = vset.pattern.permute.xlu0 0
      %1034 = vperm.xlu0 %1033, %v1031
      %v1035 = vpop.permute.xlu0 %1034
      %v1037 = vrcp.pop %v1035
      %v1038 = vmul.f32 %v1035, %v1037
      %v1039 = vsub.f32 1.0, %v1038
      %v1040 = vmul.f32 %v1037, %v1039
      %v1041 = vadd.f32 %v1037, %v1040
      %vm1042 = vweird.f32 %v1035
      %vm1043 = vweird.f32 %v1037
      %vm1044 = vmor %vm1042, %vm1043
      %v1045 = vsel %vm1044, %v1037, %v1041
      %v1046 = vand.u32 2147483647, %v1035
      %vm1047 = vcmp.eq.f32.partialorder %v1046, 8.507059e+37
      %v1048 = vand.u32 %v1035, 2147483648
      %v1049 = vor.u32 1.1754944e-38, %v1048
      %v1050 = vsel %vm1047, %v1049, %v1045
      %v1051 = vmul.f32 %v1029, %v1050
      %vm1052 = vcmp.gt.f32.partialorder %v983, 0.0
      %v1053 = vsel %vm1052, 1, 0
      %1054 = vset.pattern.permute.xlu0 0
      %1055 = vperm.xlu0 %1054, %v1053
      %v1056 = vpop.permute.xlu0 %1055
      %vm1057 = vcmp.eq.s32.totalorder %v1056, 1
      %v1058 = vsel %vm1057, %v990, -1e+30
      %v1059 = vrot.slane %v1058, 4
      %v1060 = vmax.f32 %v1058, %v1059
      %v1061 = vrot.slane %v1060, 2
      %v1062 = vmax.f32 %v1060, %v1061
      %v1063 = vrot.slane %v1062, 1
      %v1064 = vmax.f32 %v1062, %v1063
      %vm1065 = vcmp.gt.f32.partialorder %v1009, 0.0
      %v1066 = vsel %vm1065, 1, 0
      %1067 = vset.pattern.permute.xlu0 0
      %1068 = vperm.xlu0 %1067, %v1066
      %v1069 = vpop.permute.xlu0 %1068
      %vm1070 = vcmp.eq.s32.totalorder %v1069, 1
      %v1071 = vsel %vm1070, %v1064, 0.0
      %v1072 = vadd.f32 %v565, %v818
      %v1073 = vadd.f32 %v1072, %v1071
      %v1074 = vadd.f32 %v545, %v798
      %v1075 = vadd.f32 %v1074, %v1051
      %v1076 = vld [vmem:[%s3] sm:$0xff]
      %v1077 = vld [vmem:[%s3 + $0x8] sm:$0xff]
      %v1078 = vld [vmem:[%s3 + $0x10] sm:$0xff]
      %v1079 = vld [vmem:[%s3 + $0x18] sm:$0xff]
      %v1080 = vld [vmem:[%s3 + $0x20] sm:$0xff]
      %v1081 = vld [vmem:[%s3 + $0x28] sm:$0xff]
      %v1082 = vld [vmem:[%s3 + $0x30] sm:$0xff]
      %v1083 = vld [vmem:[%s3 + $0x38] sm:$0xff]
      %v1084 = vld [vmem:[%s3 + $0x40] sm:$0xff]
      %v1085 = vld [vmem:[%s3 + $0x48] sm:$0xff]
      %v1086 = vld [vmem:[%s3 + $0x50] sm:$0xff]
      %v1087 = vld [vmem:[%s3 + $0x58] sm:$0xff]
      %v1088 = vld [vmem:[%s3 + $0x60] sm:$0xff]
      %v1089 = vld [vmem:[%s3 + $0x68] sm:$0xff]
      %v1090 = vld [vmem:[%s3 + $0x70] sm:$0xff]
      %v1091 = vld [vmem:[%s3 + $0x78] sm:$0xff]
      %s1092 = scalar_lea.vmem %s3, 128
      %v1093 = vld [vmem:[%s1092] sm:$0xff]
      %v1094 = vld [vmem:[%s1092 + $0x8] sm:$0xff]
      %v1095 = vld [vmem:[%s1092 + $0x10] sm:$0xff]
      %v1096 = vld [vmem:[%s1092 + $0x18] sm:$0xff]
      %v1097 = vld [vmem:[%s1092 + $0x20] sm:$0xff]
      %v1098 = vld [vmem:[%s1092 + $0x28] sm:$0xff]
      %v1099 = vld [vmem:[%s1092 + $0x30] sm:$0xff]
      %v1100 = vld [vmem:[%s1092 + $0x38] sm:$0xff]
      %v1101 = vld [vmem:[%s1092 + $0x40] sm:$0xff]
      %v1102 = vld [vmem:[%s1092 + $0x48] sm:$0xff]
      %v1103 = vld [vmem:[%s1092 + $0x50] sm:$0xff]
      %v1104 = vld [vmem:[%s1092 + $0x58] sm:$0xff]
      %v1105 = vld [vmem:[%s1092 + $0x60] sm:$0xff]
      %v1106 = vld [vmem:[%s1092 + $0x68] sm:$0xff]
      %v1107 = vld [vmem:[%s1092 + $0x70] sm:$0xff]
      %v1108 = vld [vmem:[%s1092 + $0x78] sm:$0xff]
      %1109 = vmatpush.msra.mxu0 %v1108
      %1110 = vmatpush.msra.mxu0 %v1107
      %1111 = vmatpush.msra.mxu0 %v1106
      %1112 = vmatpush.msra.mxu0 %v1105
      %1113 = vmatpush.msra.mxu0 %v1104
      %1114 = vmatpush.msra.mxu0 %v1103
      %1115 = vmatpush.msra.mxu0 %v1102
      %1116 = vmatpush.msra.mxu0 %v1101
      %1117 = vmatpush.msra.mxu0 %v1100
      %1118 = vmatpush.msra.mxu0 %v1099
      %1119 = vmatpush.msra.mxu0 %v1098
      %1120 = vmatpush.msra.mxu0 %v1097
      %1121 = vmatpush.msra.mxu0 %v1096
      %1122 = vmatpush.msra.mxu0 %v1095
      %1123 = vmatpush.msra.mxu0 %v1094
      %1124 = vmatpush.msra.mxu0 %v1093
      %1125 = vmatmul.f32.gmra.mxu0 %v1075
      %v1126 = vpop.f32.mrf.mxu0
      %v1127 = vadd.f32 0.0, %v1126
      %1128 = vdwg.mxu0
      %1129 = vmatpush.msra.mxu0 %v1091
      %1130 = vmatpush.msra.mxu0 %v1090
      %1131 = vmatpush.msra.mxu0 %v1089
      %1132 = vmatpush.msra.mxu0 %v1088
      %1133 = vmatpush.msra.mxu0 %v1087
      %1134 = vmatpush.msra.mxu0 %v1086
      %1135 = vmatpush.msra.mxu0 %v1085
      %1136 = vmatpush.msra.mxu0 %v1084
      %1137 = vmatpush.msra.mxu0 %v1083
      %1138 = vmatpush.msra.mxu0 %v1082
      %1139 = vmatpush.msra.mxu0 %v1081
      %1140 = vmatpush.msra.mxu0 %v1080
      %1141 = vmatpush.msra.mxu0 %v1079
      %1142 = vmatpush.msra.mxu0 %v1078
      %1143 = vmatpush.msra.mxu0 %v1077
      %1144 = vmatpush.msra.mxu0 %v1076
      %1145 = vmatmul.f32.gmra.mxu0 %v1073
      %v1146 = vpop.f32.mrf.mxu0
      %v1147 = vadd.f32 %v1127, %v1146
      %1148 = vdwg.mxu0
      %v1149 = vld [vmem:[%s4 + $0x6] sm:$0x1]
      %v1150 = vadd.f32 %v1147, %v1149
      %v1151 = vmax.f32 %v1150, 0.0
      %s1152 = scalar_lea.vmem %s3, 256
      %v1153 = vld [vmem:[%s1152] sm:$0xff]
      %v1154 = vld [vmem:[%s1152 + $0x8] sm:$0xff]
      %v1155 = vld [vmem:[%s1152 + $0x10] sm:$0xff]
      %v1156 = vld [vmem:[%s1152 + $0x18] sm:$0xff]
      %v1157 = vld [vmem:[%s1152 + $0x20] sm:$0xff]
      %v1158 = vld [vmem:[%s1152 + $0x28] sm:$0xff]
      %v1159 = vld [vmem:[%s1152 + $0x30] sm:$0xff]
      %v1160 = vld [vmem:[%s1152 + $0x38] sm:$0xff]
      %v1161 = vld [vmem:[%s1152 + $0x40] sm:$0xff]
      %v1162 = vld [vmem:[%s1152 + $0x48] sm:$0xff]
      %v1163 = vld [vmem:[%s1152 + $0x50] sm:$0xff]
      %v1164 = vld [vmem:[%s1152 + $0x58] sm:$0xff]
      %v1165 = vld [vmem:[%s1152 + $0x60] sm:$0xff]
      %v1166 = vld [vmem:[%s1152 + $0x68] sm:$0xff]
      %v1167 = vld [vmem:[%s1152 + $0x70] sm:$0xff]
      %v1168 = vld [vmem:[%s1152 + $0x78] sm:$0xff]
      %v1169 = vld [vmem:[%s4 + $0x7] sm:$0x1]
      %1170 = vmatpush.msra.mxu0 %v1168
      %1171 = vmatpush.msra.mxu0 %v1167
      %1172 = vmatpush.msra.mxu0 %v1166
      %1173 = vmatpush.msra.mxu0 %v1165
      %1174 = vmatpush.msra.mxu0 %v1164
      %1175 = vmatpush.msra.mxu0 %v1163
      %1176 = vmatpush.msra.mxu0 %v1162
      %1177 = vmatpush.msra.mxu0 %v1161
      %1178 = vmatpush.msra.mxu0 %v1160
      %1179 = vmatpush.msra.mxu0 %v1159
      %1180 = vmatpush.msra.mxu0 %v1158
      %1181 = vmatpush.msra.mxu0 %v1157
      %1182 = vmatpush.msra.mxu0 %v1156
      %1183 = vmatpush.msra.mxu0 %v1155
      %1184 = vmatpush.msra.mxu0 %v1154
      %1185 = vmatpush.msra.mxu0 %v1153
      %1186 = vmatmul.f32.gmra.mxu0 %v1151
      %v1187 = vpop.f32.mrf.mxu0
      %v1188 = vadd.f32 %v1169, %v1187
      %1189 = vdwg.mxu0
      %v1190 = vmax.f32 %v1188, 0.0
      %s1191 = scalar_lea.vmem %s3, 384
      %v1192 = vld [vmem:[%s1191] sm:$0xff]
      %v1193 = vld [vmem:[%s1191 + $0x8] sm:$0xff]
      %v1194 = vld [vmem:[%s1191 + $0x10] sm:$0xff]
      %v1195 = vld [vmem:[%s1191 + $0x18] sm:$0xff]
      %v1196 = vld [vmem:[%s1191 + $0x20] sm:$0xff]
      %v1197 = vld [vmem:[%s1191 + $0x28] sm:$0xff]
      %v1198 = vld [vmem:[%s1191 + $0x30] sm:$0xff]
      %v1199 = vld [vmem:[%s1191 + $0x38] sm:$0xff]
      %v1200 = vld [vmem:[%s1191 + $0x40] sm:$0xff]
      %v1201 = vld [vmem:[%s1191 + $0x48] sm:$0xff]
      %v1202 = vld [vmem:[%s1191 + $0x50] sm:$0xff]
      %v1203 = vld [vmem:[%s1191 + $0x58] sm:$0xff]
      %v1204 = vld [vmem:[%s1191 + $0x60] sm:$0xff]
      %v1205 = vld [vmem:[%s1191 + $0x68] sm:$0xff]
      %v1206 = vld [vmem:[%s1191 + $0x70] sm:$0xff]
      %v1207 = vld [vmem:[%s1191 + $0x78] sm:$0xff]
      %v1208 = vld [vmem:[%s4 + $0x8] sm:$0x1]
      %1209 = vmatpush.msra.mxu0 %v1207
      %1210 = vmatpush.msra.mxu0 %v1206
      %1211 = vmatpush.msra.mxu0 %v1205
      %1212 = vmatpush.msra.mxu0 %v1204
      %1213 = vmatpush.msra.mxu0 %v1203
      %1214 = vmatpush.msra.mxu0 %v1202
      %1215 = vmatpush.msra.mxu0 %v1201
      %1216 = vmatpush.msra.mxu0 %v1200
      %1217 = vmatpush.msra.mxu0 %v1199
      %1218 = vmatpush.msra.mxu0 %v1198
      %1219 = vmatpush.msra.mxu0 %v1197
      %1220 = vmatpush.msra.mxu0 %v1196
      %1221 = vmatpush.msra.mxu0 %v1195
      %1222 = vmatpush.msra.mxu0 %v1194
      %1223 = vmatpush.msra.mxu0 %v1193
      %1224 = vmatpush.msra.mxu0 %v1192
      %1225 = vmatmul.f32.gmra.mxu0 %v1190
      %v1226 = vpop.f32.mrf.mxu0
      %v1227 = vadd.f32 %v1208, %v1226
      %1228 = vdwg.mxu0
      %1229 = vst [vmem:[%s234] sm:$0x1] %v1227
      %p1230 = scmp.lt.s32.totalorder %s16, 1
      %s1231 = scalar_select %p1230, %s16, 1
      %s1232 = scalar_lea.vmem %s5, %s1231
      // Predicated region
      $region41: #{net_forward.1} parent=39 // pred_check
        %p1233 = pneg %p149
      $region42: #{net_forward.1} parent=39 // pred_check_branch
        %1235 = sbr.rel (%p1233) target = $region44
      $region43: #{net_forward.1} parent=39 // pred_region
        _
      $region44: #{net_forward.1} parent=39 // pred_fallthru
        _
    $region40: #{net_forward.1} parent=5 // pred_fallthru
      _
    %p1236 = scmp.le.s32.totalorder 2, %s11
    // Predicated region
    $region45: #{net_forward.1} parent=5 // pred_check
      %p1237 = pneg %p1236
    $region46: #{net_forward.1} parent=5 // pred_check_branch
      %1239 = sbr.rel (%p1237) target = $region48
    $region47: #{net_forward.1} parent=5 // pred_region
      %s1240 = ssub.s32 %s11, 2
      // Predicated region
      $region49: #{net_forward.1} parent=47 // pred_check
        %p1241 = pneg %p155
      $region50: #{net_forward.1} parent=47 // pred_check_branch
        %1243 = sbr.rel (%p1241) target = $region52
      $region51: #{net_forward.1} parent=47 // pred_region
        %p1244 = scmp.lt.s32.totalorder %s17, 1
        %s1245 = scalar_select %p1244, %s17, 1
        %s1246 = scalar_lea.vmem %s5, %s1245
      $region52: #{net_forward.1} parent=47 // pred_fallthru
        _
    $region48: #{net_forward.1} parent=5 // pred_fallthru
      _
  $region6: #{net_forward.1} parent=0 // loop_footer
    %s15 = sadd.s32 1, %s11
  $region7: #{net_forward.1} parent=0 // loop_footer_branch
    %10 = sbr.rel target = $region3
  $region8: #{net_forward.1} parent=0 // loop_exit
    _

</llo_original>
